<compile_context>
chip_gen: v7x
topology: tpu7x:2x2x1
jax: 0.10.0
libtpu: 0.0.40
codegen_flags: <defaults>
</compile_context>

<pallas_src>
import functools

import jax
import jax.numpy as jnp
import numpy as np
from jax.experimental import pallas as pl
from jax.experimental.pallas import tpu as pltpu


def _round_up(x: int, m: int) -> int:
    return (x + m - 1) // m * m


def _scatter_add_kernel(idx_ref, feat_ref, u_hbm, out_hbm,
                        rbuf, wbuf, rsem, wsem,
                        *, n_pool, block_rows, nbuf):
    """Scatter-add `block_rows` pooled rows into the aliased skip/output slab.

    idx_ref  : (n_pool_padded,) int32 in SMEM (scalar prefetch).
    feat_ref : (block_rows, CMp) VMEM block of pooled features (auto-pipelined).
    u_hbm    : (n_full, CMp) HBM ref, aliased with out_hbm (unused directly).
    out_hbm  : (n_full, CMp) HBM ref; destination rows are read-modify-written via manual DMA.
    rbuf/wbuf: (nbuf, 1, CMp) rotating VMEM row buffers (read staging / write staging).
    rsem/wsem: (nbuf,) DMA semaphores.
    """
    del u_hbm  # same buffer as out_hbm (input_output_aliases); read-modify-write out_hbm.
    base = pl.program_id(0) * block_rows

    def start_read(b, slot):
        row = idx_ref[base + b]
        pltpu.make_async_copy(out_hbm.at[pl.ds(row, 1)], rbuf.at[slot],
                              rsem.at[slot]).start()

    def wait_read(slot):
        pltpu.make_async_copy(out_hbm.at[pl.ds(0, 1)], rbuf.at[slot],
                              rsem.at[slot]).wait()

    def start_write(b, slot):
        row = idx_ref[base + b]
        pltpu.make_async_copy(wbuf.at[slot], out_hbm.at[pl.ds(row, 1)],
                              wsem.at[slot]).start()

    def wait_write(slot):
        pltpu.make_async_copy(wbuf.at[slot], out_hbm.at[pl.ds(0, 1)],
                              wsem.at[slot]).wait()

    # ---- prologue: prime up to `nbuf` skip-row reads -------------------------------------
    for b in range(min(nbuf, block_rows)):
        @pl.when(base + b < n_pool)
        def _(b=b):
            start_read(b, b)

    # ---- main unrolled loop: one pooled row per step, up to `nbuf` DMAs in flight --------
    for b in range(block_rows):
        slot = b % nbuf

        if b >= nbuf:
            # wbuf[slot] becomes free once the write issued `nbuf` rows ago has landed.
            @pl.when(base + (b - nbuf) < n_pool)
            def _(slot=slot):
                wait_write(slot)

        @pl.when(base + b < n_pool)
        def _(b=b, slot=slot):
            wait_read(slot)                                      # skip row available
            wbuf[slot] = rbuf[slot] + feat_ref[pl.ds(b, 1), :]   # skip + pooled feature
            start_write(b, slot)                                 # write back to its node row

        if b + nbuf < block_rows:
            # Prefetch the skip row needed `nbuf` iterations from now into this slot.
            @pl.when(base + b + nbuf < n_pool)
            def _(b=b, slot=slot):
                start_read(b + nbuf, slot)

    # ---- epilogue: drain outstanding writes ----------------------------------------------
    for b in range(max(0, block_rows - nbuf), block_rows):
        slot = b % nbuf

        @pl.when(base + b < n_pool)
        def _(slot=slot):
            wait_write(slot)


def _unpool_fused(idx, feat_slab, u_slab, *, n_pool, block_rows, nbuf):
    """feat_slab: [n_pool_padded, CMp], u_slab: [n_full, CMp] (channel- and lane-padded skip)."""
    n_pool_padded, cmp_ = feat_slab.shape
    n_full = u_slab.shape[0]
    dtype = feat_slab.dtype

    kernel = functools.partial(_scatter_add_kernel, n_pool=n_pool,
                               block_rows=block_rows, nbuf=nbuf)

    grid_spec = pltpu.PrefetchScalarGridSpec(
        num_scalar_prefetch=1,                      # idx -> SMEM
        grid=(n_pool_padded // block_rows,),        # block_rows pooled nodes per grid step
        in_specs=[
            # pooled features: sublane/lane-dense (block_rows, CMp) auto-pipelined blocks
            pl.BlockSpec((block_rows, cmp_), lambda j, idx_ref: (j, 0)),
            # skip slab stays in HBM; rows are gathered/scattered manually
            pl.BlockSpec(memory_space=pl.ANY),
        ],
        out_specs=pl.BlockSpec(memory_space=pl.ANY),
        scratch_shapes=[
            pltpu.VMEM((nbuf, 1, cmp_), dtype),     # read-staging row buffers
            pltpu.VMEM((nbuf, 1, cmp_), dtype),     # write-staging row buffers
            pltpu.SemaphoreType.DMA((nbuf,)),       # read sems
            pltpu.SemaphoreType.DMA((nbuf,)),       # write sems
        ],
    )

    return pl.pallas_call(
        kernel,
        grid_spec=grid_spec,
        out_shape=jax.ShapeDtypeStruct((n_full, cmp_), dtype),
        # Alias the padded skip slab onto the output: untouched rows keep their skip values
        # with zero kernel traffic.  Flat input index counts the scalar-prefetch operand
        # (idx=0, feat=1, u=2) -> output 0; guarded by the unscattered-row test in __main__.
        input_output_aliases={2: 0},
        compiler_params=pltpu.CompilerParams(
            # idx is unique -> every grid step writes disjoint rows -> legal to shard
            # the pooled-node axis across TensorCores (helps v7x; no-op on v5e/v6e).
            dimension_semantics=("parallel",)),
    )(idx, feat_slab, u_slab)


@functools.partial(jax.jit, static_argnames=("block_rows", "nbuf"))
def unpool_layer(features, u_features, idx, *, block_rows=32, nbuf=4):
    """Dict-of-degrees forward, mirroring Unpool_Layer.forward.

    features[d]   : [N_pooled, C_in_d, 2d+1]
    u_features[d] : [N_full,   C_add_d, 2d+1]   with C_add_d <= C_in_d
    idx           : [N_pooled] UNIQUE row indices into the full node set
    """
    degs = sorted(features.keys(), key=int)
    dtype = features[degs[0]].dtype
    n_full = u_features[degs[0]].shape[0]
    n_pool = features[degs[0]].shape[0]

    feat_parts, u_parts, meta = [], [], []
    for d in degs:
        f = features[d]
        u = u_features[d]
        np_, c_in, m = f.shape
        nf, c_add, m2 = u.shape
        assert m == m2 and nf == n_full and np_ == n_pool
        assert c_add <= c_in, "module assumes fiber_in channels >= fiber_add channels"
        cm = c_in * m
        feat_parts.append(f.reshape(n_pool, cm))
        # Channel-pad the skip features; this padded slab doubles as the output buffer via
        # input_output_aliases, so the kernel never touches rows that receive no pooled node.
        u_pad = jnp.pad(u.astype(dtype), ((0, 0), (0, c_in - c_add), (0, 0)))
        u_parts.append(u_pad.reshape(n_full, cm))
        meta.append((d, c_in, m, cm))

    feat_slab = jnp.concatenate(feat_parts, axis=1)         # [N_pool, CM]
    u_slab = jnp.concatenate(u_parts, axis=1)               # [N_full, CM]
    cm_total = feat_slab.shape[1]

    # Lane-pad CM to a multiple of 128 -> dense vregs, >=512 B per-row DMAs (fp32).
    cmp_ = _round_up(cm_total, 128)
    if cmp_ != cm_total:
        feat_slab = jnp.pad(feat_slab, ((0, 0), (0, cmp_ - cm_total)))
        u_slab = jnp.pad(u_slab, ((0, 0), (0, cmp_ - cm_total)))

    # Block the pooled-node axis (multiple of 8 sublanes); ragged tail handled in-kernel.
    brows = max(8, min(int(block_rows), _round_up(n_pool, 8)))
    n_pool_padded = _round_up(n_pool, brows)
    idx32 = idx.astype(jnp.int32)
    if n_pool_padded != n_pool:
        feat_slab = jnp.pad(feat_slab, ((0, n_pool_padded - n_pool), (0, 0)))
        idx32 = jnp.pad(idx32, (0, n_pool_padded - n_pool))  # padded entries never dereferenced

    out_slab = _unpool_fused(idx32, feat_slab, u_slab,
                             n_pool=n_pool, block_rows=brows, nbuf=int(nbuf))

    # Split the fused slab back into the per-degree dict (interface of the torch module).
    # Downstream consumers that can take the fused [N_full, CM] slab directly should use
    # out_slab[:, :cm_total] and skip this reslice.
    out, off = {}, 0
    for (d, c_in, m, cm) in meta:
        out[d] = out_slab[:, off:off + cm].reshape(n_full, c_in, m)
        off += cm
    return out


def _reference_unpool(features, u_features, idx):
    """Pure-JAX reference (scatter + channel-padded add)."""
    out = {}
    for deg in features:
        f, u = features[deg], u_features[deg]
        n_pool, c_in, m = f.shape
        n_full, c_add, _ = u.shape
        z = jnp.zeros((n_full, c_in, m), f.dtype).at[idx].set(f)
        u_pad = jnp.pad(u, ((0, 0), (0, c_in - c_add), (0, 0)))
        out[deg] = z + u_pad
    return out


if __name__ == "__main__":
    key = jax.random.PRNGKey(0)
    k1, k2, k3, k4, k5 = jax.random.split(key, 5)

    # Fibers: fiber_in = {0: 32, 1: 16}, fiber_add = {0: 16, 1: 8}
    n_full, n_pool = 16, 8

    features = {
        "0": jax.random.normal(k1, (n_pool, 32, 1), dtype=jnp.float32),
        "1": jax.random.normal(k2, (n_pool, 16, 3), dtype=jnp.float32),
    }
    u_features = {
        "0": jax.random.normal(k3, (n_full, 16, 1), dtype=jnp.float32),
        "1": jax.random.normal(k4, (n_full, 8, 3), dtype=jnp.float32),
    }
    # Unique pooling indices (scatter_row semantics: one destination row per pooled node).
    idx = jax.random.permutation(k5, n_full)[:n_pool].astype(jnp.int32)
    idx_np = np.asarray(idx)
    assert len(set(idx_np.tolist())) == n_pool, "idx must be unique (pooling precondition)"

    out = unpool_layer(features, u_features, idx)
    jax.block_until_ready(out)

    ref = _reference_unpool(features, u_features, idx)
    for deg in out:
        assert out[deg].shape == ref[deg].shape
        assert jnp.allclose(out[deg], ref[deg], atol=1e-5, rtol=1e-5), f"mismatch deg {deg}"

    # Guard the input_output_aliases flat-index assumption: a row that receives no pooled
    # node must keep its (channel-padded) skip value untouched.
    untouched = sorted(set(range(n_full)) - set(idx_np.tolist()))[0]
    for deg in out:
        c_add = u_features[deg].shape[1]
        assert jnp.allclose(out[deg][untouched, :c_add], u_features[deg][untouched],
                            atol=1e-6, rtol=1e-6)
        assert jnp.allclose(out[deg][untouched, c_add:], 0.0)

    print("KERNEL_OK")
</pallas_src>

<mosaic_0001>
module attributes {stable_mosaic.version = 11 : i64} {
  func.func @_scatter_add_kernel(%arg0: i32, %arg1: memref<8xi32, #tpu.memory_space<smem>>, %arg2: memref<8x128xf32, #tpu.memory_space<vmem>>, %arg3: memref<16x128xf32, #tpu.memory_space<any>>, %arg4: memref<16x128xf32, #tpu.memory_space<any>>, %arg5: memref<4x1x128xf32, #tpu.memory_space<vmem>>, %arg6: memref<4x1x128xf32, #tpu.memory_space<vmem>>, %arg7: memref<4x!tpu.dma_semaphore, #tpu.memory_space<semaphore_mem>>, %arg8: memref<4x!tpu.dma_semaphore, #tpu.memory_space<semaphore_mem>>) attributes {dimension_semantics = [#tpu.dimension_semantics<parallel>], iteration_bounds = array<i64: 1>, scalar_prefetch = 1 : i64, scratch_operands = 4 : i64, tpu.core_type = #tpu.core_type<tc>, window_params = [{transform_indices = @transform_0, window_bounds = array<i64: 8, 128>}, {}, {}]} {
    %c8_i32 = arith.constant 8 : i32
    %0 = arith.muli %arg0, %c8_i32 : i32
    %c0_i32 = arith.constant 0 : i32
    %1 = arith.addi %0, %c0_i32 : i32
    %c8_i32_0 = arith.constant 8 : i32
    %2 = arith.cmpi slt, %1, %c8_i32_0 : i32
    %3 = arith.extui %2 : i1 to i32
    %c0_i32_1 = arith.constant 0 : i32
    %4 = arith.cmpi ne, %3, %c0_i32_1 : i32
    scf.if %4 {
      %c0_i32_68 = arith.constant 0 : i32
      %101 = arith.addi %0, %c0_i32_68 : i32
      %102 = arith.index_cast %101 : i32 to index
      %103 = memref.load %arg1[%102] : memref<8xi32, #tpu.memory_space<smem>>
      %c0_i32_69 = arith.constant 0 : i32
      %c0_i32_70 = arith.constant 0 : i32
      %c0_i32_71 = arith.constant 0 : i32
      %104 = tpu.memref_slice %arg4[%103, %c0_i32_71] : memref<16x128xf32, #tpu.memory_space<any>> -> memref<1x128xf32, #tpu.memory_space<any>>
      %c0_i32_72 = arith.constant 0 : i32
      %c0_i32_73 = arith.constant 0 : i32
      %105 = tpu.memref_slice %arg5[%c0_i32_69, %c0_i32_72, %c0_i32_73] : memref<4x1x128xf32, #tpu.memory_space<vmem>> -> memref<1x1x128xf32, #tpu.memory_space<vmem>>
      %106 = tpu.memref_squeeze %105 : memref<1x1x128xf32, #tpu.memory_space<vmem>> -> memref<1x128xf32, #tpu.memory_space<vmem>>
      %107 = tpu.memref_slice %arg7[%c0_i32_70] : memref<4x!tpu.dma_semaphore, #tpu.memory_space<semaphore_mem>> -> memref<1x!tpu.dma_semaphore, #tpu.memory_space<semaphore_mem>>
      %108 = tpu.memref_squeeze %107 : memref<1x!tpu.dma_semaphore, #tpu.memory_space<semaphore_mem>> -> memref<!tpu.dma_semaphore, #tpu.memory_space<semaphore_mem>>
      tpu.enqueue_dma source(%104 : memref<1x128xf32, #tpu.memory_space<any>>) target(%106 : memref<1x128xf32, #tpu.memory_space<vmem>>) target_semaphore(%108 : memref<!tpu.dma_semaphore, #tpu.memory_space<semaphore_mem>>)
    } else {
    }
    %c1_i32 = arith.constant 1 : i32
    %5 = arith.addi %0, %c1_i32 : i32
    %c8_i32_2 = arith.constant 8 : i32
    %6 = arith.cmpi slt, %5, %c8_i32_2 : i32
    %7 = arith.extui %6 : i1 to i32
    %c0_i32_3 = arith.constant 0 : i32
    %8 = arith.cmpi ne, %7, %c0_i32_3 : i32
    scf.if %8 {
      %c1_i32_68 = arith.constant 1 : i32
      %101 = arith.addi %0, %c1_i32_68 : i32
      %102 = arith.index_cast %101 : i32 to index
      %103 = memref.load %arg1[%102] : memref<8xi32, #tpu.memory_space<smem>>
      %c1_i32_69 = arith.constant 1 : i32
      %c1_i32_70 = arith.constant 1 : i32
      %c0_i32_71 = arith.constant 0 : i32
      %104 = tpu.memref_slice %arg4[%103, %c0_i32_71] : memref<16x128xf32, #tpu.memory_space<any>> -> memref<1x128xf32, #tpu.memory_space<any>>
      %c0_i32_72 = arith.constant 0 : i32
      %c0_i32_73 = arith.constant 0 : i32
      %105 = tpu.memref_slice %arg5[%c1_i32_69, %c0_i32_72, %c0_i32_73] : memref<4x1x128xf32, #tpu.memory_space<vmem>> -> memref<1x1x128xf32, #tpu.memory_space<vmem>>
      %106 = tpu.memref_squeeze %105 : memref<1x1x128xf32, #tpu.memory_space<vmem>> -> memref<1x128xf32, #tpu.memory_space<vmem>>
      %107 = tpu.memref_slice %arg7[%c1_i32_70] : memref<4x!tpu.dma_semaphore, #tpu.memory_space<semaphore_mem>> -> memref<1x!tpu.dma_semaphore, #tpu.memory_space<semaphore_mem>>
      %108 = tpu.memref_squeeze %107 : memref<1x!tpu.dma_semaphore, #tpu.memory_space<semaphore_mem>> -> memref<!tpu.dma_semaphore, #tpu.memory_space<semaphore_mem>>
      tpu.enqueue_dma source(%104 : memref<1x128xf32, #tpu.memory_space<any>>) target(%106 : memref<1x128xf32, #tpu.memory_space<vmem>>) target_semaphore(%108 : memref<!tpu.dma_semaphore, #tpu.memory_space<semaphore_mem>>)
    } else {
    }
    %c2_i32 = arith.constant 2 : i32
    %9 = arith.addi %0, %c2_i32 : i32
    %c8_i32_4 = arith.constant 8 : i32
    %10 = arith.cmpi slt, %9, %c8_i32_4 : i32
    %11 = arith.extui %10 : i1 to i32
    %c0_i32_5 = arith.constant 0 : i32
    %12 = arith.cmpi ne, %11, %c0_i32_5 : i32
    scf.if %12 {
      %c2_i32_68 = arith.constant 2 : i32
      %101 = arith.addi %0, %c2_i32_68 : i32
      %102 = arith.index_cast %101 : i32 to index
      %103 = memref.load %arg1[%102] : memref<8xi32, #tpu.memory_space<smem>>
      %c2_i32_69 = arith.constant 2 : i32
      %c2_i32_70 = arith.constant 2 : i32
      %c0_i32_71 = arith.constant 0 : i32
      %104 = tpu.memref_slice %arg4[%103, %c0_i32_71] : memref<16x128xf32, #tpu.memory_space<any>> -> memref<1x128xf32, #tpu.memory_space<any>>
      %c0_i32_72 = arith.constant 0 : i32
      %c0_i32_73 = arith.constant 0 : i32
      %105 = tpu.memref_slice %arg5[%c2_i32_69, %c0_i32_72, %c0_i32_73] : memref<4x1x128xf32, #tpu.memory_space<vmem>> -> memref<1x1x128xf32, #tpu.memory_space<vmem>>
      %106 = tpu.memref_squeeze %105 : memref<1x1x128xf32, #tpu.memory_space<vmem>> -> memref<1x128xf32, #tpu.memory_space<vmem>>
      %107 = tpu.memref_slice %arg7[%c2_i32_70] : memref<4x!tpu.dma_semaphore, #tpu.memory_space<semaphore_mem>> -> memref<1x!tpu.dma_semaphore, #tpu.memory_space<semaphore_mem>>
      %108 = tpu.memref_squeeze %107 : memref<1x!tpu.dma_semaphore, #tpu.memory_space<semaphore_mem>> -> memref<!tpu.dma_semaphore, #tpu.memory_space<semaphore_mem>>
      tpu.enqueue_dma source(%104 : memref<1x128xf32, #tpu.memory_space<any>>) target(%106 : memref<1x128xf32, #tpu.memory_space<vmem>>) target_semaphore(%108 : memref<!tpu.dma_semaphore, #tpu.memory_space<semaphore_mem>>)
    } else {
    }
    %c3_i32 = arith.constant 3 : i32
    %13 = arith.addi %0, %c3_i32 : i32
    %c8_i32_6 = arith.constant 8 : i32
    %14 = arith.cmpi slt, %13, %c8_i32_6 : i32
    %15 = arith.extui %14 : i1 to i32
    %c0_i32_7 = arith.constant 0 : i32
    %16 = arith.cmpi ne, %15, %c0_i32_7 : i32
    scf.if %16 {
      %c3_i32_68 = arith.constant 3 : i32
      %101 = arith.addi %0, %c3_i32_68 : i32
      %102 = arith.index_cast %101 : i32 to index
      %103 = memref.load %arg1[%102] : memref<8xi32, #tpu.memory_space<smem>>
      %c3_i32_69 = arith.constant 3 : i32
      %c3_i32_70 = arith.constant 3 : i32
      %c0_i32_71 = arith.constant 0 : i32
      %104 = tpu.memref_slice %arg4[%103, %c0_i32_71] : memref<16x128xf32, #tpu.memory_space<any>> -> memref<1x128xf32, #tpu.memory_space<any>>
      %c0_i32_72 = arith.constant 0 : i32
      %c0_i32_73 = arith.constant 0 : i32
      %105 = tpu.memref_slice %arg5[%c3_i32_69, %c0_i32_72, %c0_i32_73] : memref<4x1x128xf32, #tpu.memory_space<vmem>> -> memref<1x1x128xf32, #tpu.memory_space<vmem>>
      %106 = tpu.memref_squeeze %105 : memref<1x1x128xf32, #tpu.memory_space<vmem>> -> memref<1x128xf32, #tpu.memory_space<vmem>>
      %107 = tpu.memref_slice %arg7[%c3_i32_70] : memref<4x!tpu.dma_semaphore, #tpu.memory_space<semaphore_mem>> -> memref<1x!tpu.dma_semaphore, #tpu.memory_space<semaphore_mem>>
      %108 = tpu.memref_squeeze %107 : memref<1x!tpu.dma_semaphore, #tpu.memory_space<semaphore_mem>> -> memref<!tpu.dma_semaphore, #tpu.memory_space<semaphore_mem>>
      tpu.enqueue_dma source(%104 : memref<1x128xf32, #tpu.memory_space<any>>) target(%106 : memref<1x128xf32, #tpu.memory_space<vmem>>) target_semaphore(%108 : memref<!tpu.dma_semaphore, #tpu.memory_space<semaphore_mem>>)
    } else {
    }
    %c0_i32_8 = arith.constant 0 : i32
    %17 = arith.addi %0, %c0_i32_8 : i32
    %c8_i32_9 = arith.constant 8 : i32
    %18 = arith.cmpi slt, %17, %c8_i32_9 : i32
    %19 = arith.extui %18 : i1 to i32
    %c0_i32_10 = arith.constant 0 : i32
    %20 = arith.cmpi ne, %19, %c0_i32_10 : i32
    scf.if %20 {
      %c0_i32_68 = arith.constant 0 : i32
      %c0_i32_69 = arith.constant 0 : i32
      %c0_i32_70 = arith.constant 0 : i32
      %c0_i32_71 = arith.constant 0 : i32
      %101 = tpu.memref_slice %arg4[%c0_i32_70, %c0_i32_71] : memref<16x128xf32, #tpu.memory_space<any>> -> memref<1x128xf32, #tpu.memory_space<any>>
      %c0_i32_72 = arith.constant 0 : i32
      %c0_i32_73 = arith.constant 0 : i32
      %102 = tpu.memref_slice %arg5[%c0_i32_68, %c0_i32_72, %c0_i32_73] : memref<4x1x128xf32, #tpu.memory_space<vmem>> -> memref<1x1x128xf32, #tpu.memory_space<vmem>>
      %103 = tpu.memref_squeeze %102 : memref<1x1x128xf32, #tpu.memory_space<vmem>> -> memref<1x128xf32, #tpu.memory_space<vmem>>
      %104 = tpu.memref_slice %arg7[%c0_i32_69] : memref<4x!tpu.dma_semaphore, #tpu.memory_space<semaphore_mem>> -> memref<1x!tpu.dma_semaphore, #tpu.memory_space<semaphore_mem>>
      %105 = tpu.memref_squeeze %104 : memref<1x!tpu.dma_semaphore, #tpu.memory_space<semaphore_mem>> -> memref<!tpu.dma_semaphore, #tpu.memory_space<semaphore_mem>>
      tpu.wait_dma2 semaphore(%105 : memref<!tpu.dma_semaphore, #tpu.memory_space<semaphore_mem>>) src(%101 : memref<1x128xf32, #tpu.memory_space<any>>) dst(%103 : memref<1x128xf32, #tpu.memory_space<vmem>>)
      %c0 = arith.constant 0 : index
      %c0_74 = arith.constant 0 : index
      %c0_75 = arith.constant 0 : index
      %106 = vector.load %arg5[%c0, %c0_74, %c0_75] : memref<4x1x128xf32, #tpu.memory_space<vmem>>, vector<1x1x128xf32>
      %107 = vector.shape_cast %106 : vector<1x1x128xf32> to vector<1x128xf32>
      %c0_76 = arith.constant 0 : index
      %c0_77 = arith.constant 0 : index
      %108 = vector.load %arg2[%c0_76, %c0_77] : memref<8x128xf32, #tpu.memory_space<vmem>>, vector<1x128xf32>
      %109 = arith.addf %107, %108 : vector<1x128xf32>
      %c0_78 = arith.constant 0 : index
      %c0_79 = arith.constant 0 : index
      %c0_80 = arith.constant 0 : index
      %110 = vector.load %arg6[%c0_78, %c0_79, %c0_80] : memref<4x1x128xf32, #tpu.memory_space<vmem>>, vector<1x1x128xf32>
      %111 = vector.shape_cast %110 : vector<1x1x128xf32> to vector<1x128xf32>
      %112 = vector.shape_cast %109 : vector<1x128xf32> to vector<1x1x128xf32>
      tpu.vector_store %arg6[%c0_78, %c0_79, %c0_80], %112 {strides = array<i32>} : memref<4x1x128xf32, #tpu.memory_space<vmem>>, vector<1x1x128xf32>,
      %c0_i32_81 = arith.constant 0 : i32
      %113 = arith.addi %0, %c0_i32_81 : i32
      %114 = arith.index_cast %113 : i32 to index
      %115 = memref.load %arg1[%114] : memref<8xi32, #tpu.memory_space<smem>>
      %c0_i32_82 = arith.constant 0 : i32
      %c0_i32_83 = arith.constant 0 : i32
      %c0_i32_84 = arith.constant 0 : i32
      %c0_i32_85 = arith.constant 0 : i32
      %116 = tpu.memref_slice %arg6[%c0_i32_82, %c0_i32_84, %c0_i32_85] : memref<4x1x128xf32, #tpu.memory_space<vmem>> -> memref<1x1x128xf32, #tpu.memory_space<vmem>>
      %117 = tpu.memref_squeeze %116 : memref<1x1x128xf32, #tpu.memory_space<vmem>> -> memref<1x128xf32, #tpu.memory_space<vmem>>
      %c0_i32_86 = arith.constant 0 : i32
      %118 = tpu.memref_slice %arg4[%115, %c0_i32_86] : memref<16x128xf32, #tpu.memory_space<any>> -> memref<1x128xf32, #tpu.memory_space<any>>
      %119 = tpu.memref_slice %arg8[%c0_i32_83] : memref<4x!tpu.dma_semaphore, #tpu.memory_space<semaphore_mem>> -> memref<1x!tpu.dma_semaphore, #tpu.memory_space<semaphore_mem>>
      %120 = tpu.memref_squeeze %119 : memref<1x!tpu.dma_semaphore, #tpu.memory_space<semaphore_mem>> -> memref<!tpu.dma_semaphore, #tpu.memory_space<semaphore_mem>>
      tpu.enqueue_dma source(%117 : memref<1x128xf32, #tpu.memory_space<vmem>>) target(%118 : memref<1x128xf32, #tpu.memory_space<any>>) target_semaphore(%120 : memref<!tpu.dma_semaphore, #tpu.memory_space<semaphore_mem>>)
    } else {
    }
    %c0_i32_11 = arith.constant 0 : i32
    %21 = arith.addi %0, %c0_i32_11 : i32
    %c4_i32 = arith.constant 4 : i32
    %22 = arith.addi %21, %c4_i32 : i32
    %c8_i32_12 = arith.constant 8 : i32
    %23 = arith.cmpi slt, %22, %c8_i32_12 : i32
    %24 = arith.extui %23 : i1 to i32
    %c0_i32_13 = arith.constant 0 : i32
    %25 = arith.cmpi ne, %24, %c0_i32_13 : i32
    scf.if %25 {
      %c4_i32_68 = arith.constant 4 : i32
      %101 = arith.addi %0, %c4_i32_68 : i32
      %102 = arith.index_cast %101 : i32 to index
      %103 = memref.load %arg1[%102] : memref<8xi32, #tpu.memory_space<smem>>
      %c0_i32_69 = arith.constant 0 : i32
      %c0_i32_70 = arith.constant 0 : i32
      %c0_i32_71 = arith.constant 0 : i32
      %104 = tpu.memref_slice %arg4[%103, %c0_i32_71] : memref<16x128xf32, #tpu.memory_space<any>> -> memref<1x128xf32, #tpu.memory_space<any>>
      %c0_i32_72 = arith.constant 0 : i32
      %c0_i32_73 = arith.constant 0 : i32
      %105 = tpu.memref_slice %arg5[%c0_i32_69, %c0_i32_72, %c0_i32_73] : memref<4x1x128xf32, #tpu.memory_space<vmem>> -> memref<1x1x128xf32, #tpu.memory_space<vmem>>
      %106 = tpu.memref_squeeze %105 : memref<1x1x128xf32, #tpu.memory_space<vmem>> -> memref<1x128xf32, #tpu.memory_space<vmem>>
      %107 = tpu.memref_slice %arg7[%c0_i32_70] : memref<4x!tpu.dma_semaphore, #tpu.memory_space<semaphore_mem>> -> memref<1x!tpu.dma_semaphore, #tpu.memory_space<semaphore_mem>>
      %108 = tpu.memref_squeeze %107 : memref<1x!tpu.dma_semaphore, #tpu.memory_space<semaphore_mem>> -> memref<!tpu.dma_semaphore, #tpu.memory_space<semaphore_mem>>
      tpu.enqueue_dma source(%104 : memref<1x128xf32, #tpu.memory_space<any>>) target(%106 : memref<1x128xf32, #tpu.memory_space<vmem>>) target_semaphore(%108 : memref<!tpu.dma_semaphore, #tpu.memory_space<semaphore_mem>>)
    } else {
    }
    %c1_i32_14 = arith.constant 1 : i32
    %26 = arith.addi %0, %c1_i32_14 : i32
    %c8_i32_15 = arith.constant 8 : i32
    %27 = arith.cmpi slt, %26, %c8_i32_15 : i32
    %28 = arith.extui %27 : i1 to i32
    %c0_i32_16 = arith.constant 0 : i32
    %29 = arith.cmpi ne, %28, %c0_i32_16 : i32
    scf.if %29 {
      %c1_i32_68 = arith.constant 1 : i32
      %c1_i32_69 = arith.constant 1 : i32
      %c0_i32_70 = arith.constant 0 : i32
      %c0_i32_71 = arith.constant 0 : i32
      %101 = tpu.memref_slice %arg4[%c0_i32_70, %c0_i32_71] : memref<16x128xf32, #tpu.memory_space<any>> -> memref<1x128xf32, #tpu.memory_space<any>>
      %c0_i32_72 = arith.constant 0 : i32
      %c0_i32_73 = arith.constant 0 : i32
      %102 = tpu.memref_slice %arg5[%c1_i32_68, %c0_i32_72, %c0_i32_73] : memref<4x1x128xf32, #tpu.memory_space<vmem>> -> memref<1x1x128xf32, #tpu.memory_space<vmem>>
      %103 = tpu.memref_squeeze %102 : memref<1x1x128xf32, #tpu.memory_space<vmem>> -> memref<1x128xf32, #tpu.memory_space<vmem>>
      %104 = tpu.memref_slice %arg7[%c1_i32_69] : memref<4x!tpu.dma_semaphore, #tpu.memory_space<semaphore_mem>> -> memref<1x!tpu.dma_semaphore, #tpu.memory_space<semaphore_mem>>
      %105 = tpu.memref_squeeze %104 : memref<1x!tpu.dma_semaphore, #tpu.memory_space<semaphore_mem>> -> memref<!tpu.dma_semaphore, #tpu.memory_space<semaphore_mem>>
      tpu.wait_dma2 semaphore(%105 : memref<!tpu.dma_semaphore, #tpu.memory_space<semaphore_mem>>) src(%101 : memref<1x128xf32, #tpu.memory_space<any>>) dst(%103 : memref<1x128xf32, #tpu.memory_space<vmem>>)
      %c1 = arith.constant 1 : index
      %c0 = arith.constant 0 : index
      %c0_74 = arith.constant 0 : index
      %106 = vector.load %arg5[%c1, %c0, %c0_74] : memref<4x1x128xf32, #tpu.memory_space<vmem>>, vector<1x1x128xf32>
      %107 = vector.shape_cast %106 : vector<1x1x128xf32> to vector<1x128xf32>
      %c1_75 = arith.constant 1 : index
      %c0_76 = arith.constant 0 : index
      %108 = vector.load %arg2[%c1_75, %c0_76] : memref<8x128xf32, #tpu.memory_space<vmem>>, vector<1x128xf32>
      %109 = arith.addf %107, %108 : vector<1x128xf32>
      %c1_77 = arith.constant 1 : index
      %c0_78 = arith.constant 0 : index
      %c0_79 = arith.constant 0 : index
      %110 = vector.load %arg6[%c1_77, %c0_78, %c0_79] : memref<4x1x128xf32, #tpu.memory_space<vmem>>, vector<1x1x128xf32>
      %111 = vector.shape_cast %110 : vector<1x1x128xf32> to vector<1x128xf32>
      %112 = vector.shape_cast %109 : vector<1x128xf32> to vector<1x1x128xf32>
      tpu.vector_store %arg6[%c1_77, %c0_78, %c0_79], %112 {strides = array<i32>} : memref<4x1x128xf32, #tpu.memory_space<vmem>>, vector<1x1x128xf32>,
      %c1_i32_80 = arith.constant 1 : i32
      %113 = arith.addi %0, %c1_i32_80 : i32
      %114 = arith.index_cast %113 : i32 to index
      %115 = memref.load %arg1[%114] : memref<8xi32, #tpu.memory_space<smem>>
      %c1_i32_81 = arith.constant 1 : i32
      %c1_i32_82 = arith.constant 1 : i32
      %c0_i32_83 = arith.constant 0 : i32
      %c0_i32_84 = arith.constant 0 : i32
      %116 = tpu.memref_slice %arg6[%c1_i32_81, %c0_i32_83, %c0_i32_84] : memref<4x1x128xf32, #tpu.memory_space<vmem>> -> memref<1x1x128xf32, #tpu.memory_space<vmem>>
      %117 = tpu.memref_squeeze %116 : memref<1x1x128xf32, #tpu.memory_space<vmem>> -> memref<1x128xf32, #tpu.memory_space<vmem>>
      %c0_i32_85 = arith.constant 0 : i32
      %118 = tpu.memref_slice %arg4[%115, %c0_i32_85] : memref<16x128xf32, #tpu.memory_space<any>> -> memref<1x128xf32, #tpu.memory_space<any>>
      %119 = tpu.memref_slice %arg8[%c1_i32_82] : memref<4x!tpu.dma_semaphore, #tpu.memory_space<semaphore_mem>> -> memref<1x!tpu.dma_semaphore, #tpu.memory_space<semaphore_mem>>
      %120 = tpu.memref_squeeze %119 : memref<1x!tpu.dma_semaphore, #tpu.memory_space<semaphore_mem>> -> memref<!tpu.dma_semaphore, #tpu.memory_space<semaphore_mem>>
      tpu.enqueue_dma source(%117 : memref<1x128xf32, #tpu.memory_space<vmem>>) target(%118 : memref<1x128xf32, #tpu.memory_space<any>>) target_semaphore(%120 : memref<!tpu.dma_semaphore, #tpu.memory_space<semaphore_mem>>)
    } else {
    }
    %c1_i32_17 = arith.constant 1 : i32
    %30 = arith.addi %0, %c1_i32_17 : i32
    %c4_i32_18 = arith.constant 4 : i32
    %31 = arith.addi %30, %c4_i32_18 : i32
    %c8_i32_19 = arith.constant 8 : i32
    %32 = arith.cmpi slt, %31, %c8_i32_19 : i32
    %33 = arith.extui %32 : i1 to i32
    %c0_i32_20 = arith.constant 0 : i32
    %34 = arith.cmpi ne, %33, %c0_i32_20 : i32
    scf.if %34 {
      %c5_i32_68 = arith.constant 5 : i32
      %101 = arith.addi %0, %c5_i32_68 : i32
      %102 = arith.index_cast %101 : i32 to index
      %103 = memref.load %arg1[%102] : memref<8xi32, #tpu.memory_space<smem>>
      %c1_i32_69 = arith.constant 1 : i32
      %c1_i32_70 = arith.constant 1 : i32
      %c0_i32_71 = arith.constant 0 : i32
      %104 = tpu.memref_slice %arg4[%103, %c0_i32_71] : memref<16x128xf32, #tpu.memory_space<any>> -> memref<1x128xf32, #tpu.memory_space<any>>
      %c0_i32_72 = arith.constant 0 : i32
      %c0_i32_73 = arith.constant 0 : i32
      %105 = tpu.memref_slice %arg5[%c1_i32_69, %c0_i32_72, %c0_i32_73] : memref<4x1x128xf32, #tpu.memory_space<vmem>> -> memref<1x1x128xf32, #tpu.memory_space<vmem>>
      %106 = tpu.memref_squeeze %105 : memref<1x1x128xf32, #tpu.memory_space<vmem>> -> memref<1x128xf32, #tpu.memory_space<vmem>>
      %107 = tpu.memref_slice %arg7[%c1_i32_70] : memref<4x!tpu.dma_semaphore, #tpu.memory_space<semaphore_mem>> -> memref<1x!tpu.dma_semaphore, #tpu.memory_space<semaphore_mem>>
      %108 = tpu.memref_squeeze %107 : memref<1x!tpu.dma_semaphore, #tpu.memory_space<semaphore_mem>> -> memref<!tpu.dma_semaphore, #tpu.memory_space<semaphore_mem>>
      tpu.enqueue_dma source(%104 : memref<1x128xf32, #tpu.memory_space<any>>) target(%106 : memref<1x128xf32, #tpu.memory_space<vmem>>) target_semaphore(%108 : memref<!tpu.dma_semaphore, #tpu.memory_space<semaphore_mem>>)
    } else {
    }
    %c2_i32_21 = arith.constant 2 : i32
    %35 = arith.addi %0, %c2_i32_21 : i32
    %c8_i32_22 = arith.constant 8 : i32
    %36 = arith.cmpi slt, %35, %c8_i32_22 : i32
    %37 = arith.extui %36 : i1 to i32
    %c0_i32_23 = arith.constant 0 : i32
    %38 = arith.cmpi ne, %37, %c0_i32_23 : i32
    scf.if %38 {
      %c2_i32_68 = arith.constant 2 : i32
      %c2_i32_69 = arith.constant 2 : i32
      %c0_i32_70 = arith.constant 0 : i32
      %c0_i32_71 = arith.constant 0 : i32
      %101 = tpu.memref_slice %arg4[%c0_i32_70, %c0_i32_71] : memref<16x128xf32, #tpu.memory_space<any>> -> memref<1x128xf32, #tpu.memory_space<any>>
      %c0_i32_72 = arith.constant 0 : i32
      %c0_i32_73 = arith.constant 0 : i32
      %102 = tpu.memref_slice %arg5[%c2_i32_68, %c0_i32_72, %c0_i32_73] : memref<4x1x128xf32, #tpu.memory_space<vmem>> -> memref<1x1x128xf32, #tpu.memory_space<vmem>>
      %103 = tpu.memref_squeeze %102 : memref<1x1x128xf32, #tpu.memory_space<vmem>> -> memref<1x128xf32, #tpu.memory_space<vmem>>
      %104 = tpu.memref_slice %arg7[%c2_i32_69] : memref<4x!tpu.dma_semaphore, #tpu.memory_space<semaphore_mem>> -> memref<1x!tpu.dma_semaphore, #tpu.memory_space<semaphore_mem>>
      %105 = tpu.memref_squeeze %104 : memref<1x!tpu.dma_semaphore, #tpu.memory_space<semaphore_mem>> -> memref<!tpu.dma_semaphore, #tpu.memory_space<semaphore_mem>>
      tpu.wait_dma2 semaphore(%105 : memref<!tpu.dma_semaphore, #tpu.memory_space<semaphore_mem>>) src(%101 : memref<1x128xf32, #tpu.memory_space<any>>) dst(%103 : memref<1x128xf32, #tpu.memory_space<vmem>>)
      %c2 = arith.constant 2 : index
      %c0 = arith.constant 0 : index
      %c0_74 = arith.constant 0 : index
      %106 = vector.load %arg5[%c2, %c0, %c0_74] : memref<4x1x128xf32, #tpu.memory_space<vmem>>, vector<1x1x128xf32>
      %107 = vector.shape_cast %106 : vector<1x1x128xf32> to vector<1x128xf32>
      %c2_75 = arith.constant 2 : index
      %c0_76 = arith.constant 0 : index
      %108 = vector.load %arg2[%c2_75, %c0_76] : memref<8x128xf32, #tpu.memory_space<vmem>>, vector<1x128xf32>
      %109 = arith.addf %107, %108 : vector<1x128xf32>
      %c2_77 = arith.constant 2 : index
      %c0_78 = arith.constant 0 : index
      %c0_79 = arith.constant 0 : index
      %110 = vector.load %arg6[%c2_77, %c0_78, %c0_79] : memref<4x1x128xf32, #tpu.memory_space<vmem>>, vector<1x1x128xf32>
      %111 = vector.shape_cast %110 : vector<1x1x128xf32> to vector<1x128xf32>
      %112 = vector.shape_cast %109 : vector<1x128xf32> to vector<1x1x128xf32>
      tpu.vector_store %arg6[%c2_77, %c0_78, %c0_79], %112 {strides = array<i32>} : memref<4x1x128xf32, #tpu.memory_space<vmem>>, vector<1x1x128xf32>,
      %c2_i32_80 = arith.constant 2 : i32
      %113 = arith.addi %0, %c2_i32_80 : i32
      %114 = arith.index_cast %113 : i32 to index
      %115 = memref.load %arg1[%114] : memref<8xi32, #tpu.memory_space<smem>>
      %c2_i32_81 = arith.constant 2 : i32
      %c2_i32_82 = arith.constant 2 : i32
      %c0_i32_83 = arith.constant 0 : i32
      %c0_i32_84 = arith.constant 0 : i32
      %116 = tpu.memref_slice %arg6[%c2_i32_81, %c0_i32_83, %c0_i32_84] : memref<4x1x128xf32, #tpu.memory_space<vmem>> -> memref<1x1x128xf32, #tpu.memory_space<vmem>>
      %117 = tpu.memref_squeeze %116 : memref<1x1x128xf32, #tpu.memory_space<vmem>> -> memref<1x128xf32, #tpu.memory_space<vmem>>
      %c0_i32_85 = arith.constant 0 : i32
      %118 = tpu.memref_slice %arg4[%115, %c0_i32_85] : memref<16x128xf32, #tpu.memory_space<any>> -> memref<1x128xf32, #tpu.memory_space<any>>
      %119 = tpu.memref_slice %arg8[%c2_i32_82] : memref<4x!tpu.dma_semaphore, #tpu.memory_space<semaphore_mem>> -> memref<1x!tpu.dma_semaphore, #tpu.memory_space<semaphore_mem>>
      %120 = tpu.memref_squeeze %119 : memref<1x!tpu.dma_semaphore, #tpu.memory_space<semaphore_mem>> -> memref<!tpu.dma_semaphore, #tpu.memory_space<semaphore_mem>>
      tpu.enqueue_dma source(%117 : memref<1x128xf32, #tpu.memory_space<vmem>>) target(%118 : memref<1x128xf32, #tpu.memory_space<any>>) target_semaphore(%120 : memref<!tpu.dma_semaphore, #tpu.memory_space<semaphore_mem>>)
    } else {
    }
    %c2_i32_24 = arith.constant 2 : i32
    %39 = arith.addi %0, %c2_i32_24 : i32
    %c4_i32_25 = arith.constant 4 : i32
    %40 = arith.addi %39, %c4_i32_25 : i32
    %c8_i32_26 = arith.constant 8 : i32
    %41 = arith.cmpi slt, %40, %c8_i32_26 : i32
    %42 = arith.extui %41 : i1 to i32
    %c0_i32_27 = arith.constant 0 : i32
    %43 = arith.cmpi ne, %42, %c0_i32_27 : i32
    scf.if %43 {
      %c6_i32_68 = arith.constant 6 : i32
      %101 = arith.addi %0, %c6_i32_68 : i32
      %102 = arith.index_cast %101 : i32 to index
      %103 = memref.load %arg1[%102] : memref<8xi32, #tpu.memory_space<smem>>
      %c2_i32_69 = arith.constant 2 : i32
      %c2_i32_70 = arith.constant 2 : i32
      %c0_i32_71 = arith.constant 0 : i32
      %104 = tpu.memref_slice %arg4[%103, %c0_i32_71] : memref<16x128xf32, #tpu.memory_space<any>> -> memref<1x128xf32, #tpu.memory_space<any>>
      %c0_i32_72 = arith.constant 0 : i32
      %c0_i32_73 = arith.constant 0 : i32
      %105 = tpu.memref_slice %arg5[%c2_i32_69, %c0_i32_72, %c0_i32_73] : memref<4x1x128xf32, #tpu.memory_space<vmem>> -> memref<1x1x128xf32, #tpu.memory_space<vmem>>
      %106 = tpu.memref_squeeze %105 : memref<1x1x128xf32, #tpu.memory_space<vmem>> -> memref<1x128xf32, #tpu.memory_space<vmem>>
      %107 = tpu.memref_slice %arg7[%c2_i32_70] : memref<4x!tpu.dma_semaphore, #tpu.memory_space<semaphore_mem>> -> memref<1x!tpu.dma_semaphore, #tpu.memory_space<semaphore_mem>>
      %108 = tpu.memref_squeeze %107 : memref<1x!tpu.dma_semaphore, #tpu.memory_space<semaphore_mem>> -> memref<!tpu.dma_semaphore, #tpu.memory_space<semaphore_mem>>
      tpu.enqueue_dma source(%104 : memref<1x128xf32, #tpu.memory_space<any>>) target(%106 : memref<1x128xf32, #tpu.memory_space<vmem>>) target_semaphore(%108 : memref<!tpu.dma_semaphore, #tpu.memory_space<semaphore_mem>>)
    } else {
    }
    %c3_i32_28 = arith.constant 3 : i32
    %44 = arith.addi %0, %c3_i32_28 : i32
    %c8_i32_29 = arith.constant 8 : i32
    %45 = arith.cmpi slt, %44, %c8_i32_29 : i32
    %46 = arith.extui %45 : i1 to i32
    %c0_i32_30 = arith.constant 0 : i32
    %47 = arith.cmpi ne, %46, %c0_i32_30 : i32
    scf.if %47 {
      %c3_i32_68 = arith.constant 3 : i32
      %c3_i32_69 = arith.constant 3 : i32
      %c0_i32_70 = arith.constant 0 : i32
      %c0_i32_71 = arith.constant 0 : i32
      %101 = tpu.memref_slice %arg4[%c0_i32_70, %c0_i32_71] : memref<16x128xf32, #tpu.memory_space<any>> -> memref<1x128xf32, #tpu.memory_space<any>>
      %c0_i32_72 = arith.constant 0 : i32
      %c0_i32_73 = arith.constant 0 : i32
      %102 = tpu.memref_slice %arg5[%c3_i32_68, %c0_i32_72, %c0_i32_73] : memref<4x1x128xf32, #tpu.memory_space<vmem>> -> memref<1x1x128xf32, #tpu.memory_space<vmem>>
      %103 = tpu.memref_squeeze %102 : memref<1x1x128xf32, #tpu.memory_space<vmem>> -> memref<1x128xf32, #tpu.memory_space<vmem>>
      %104 = tpu.memref_slice %arg7[%c3_i32_69] : memref<4x!tpu.dma_semaphore, #tpu.memory_space<semaphore_mem>> -> memref<1x!tpu.dma_semaphore, #tpu.memory_space<semaphore_mem>>
      %105 = tpu.memref_squeeze %104 : memref<1x!tpu.dma_semaphore, #tpu.memory_space<semaphore_mem>> -> memref<!tpu.dma_semaphore, #tpu.memory_space<semaphore_mem>>
      tpu.wait_dma2 semaphore(%105 : memref<!tpu.dma_semaphore, #tpu.memory_space<semaphore_mem>>) src(%101 : memref<1x128xf32, #tpu.memory_space<any>>) dst(%103 : memref<1x128xf32, #tpu.memory_space<vmem>>)
      %c3 = arith.constant 3 : index
      %c0 = arith.constant 0 : index
      %c0_74 = arith.constant 0 : index
      %106 = vector.load %arg5[%c3, %c0, %c0_74] : memref<4x1x128xf32, #tpu.memory_space<vmem>>, vector<1x1x128xf32>
      %107 = vector.shape_cast %106 : vector<1x1x128xf32> to vector<1x128xf32>
      %c3_75 = arith.constant 3 : index
      %c0_76 = arith.constant 0 : index
      %108 = vector.load %arg2[%c3_75, %c0_76] : memref<8x128xf32, #tpu.memory_space<vmem>>, vector<1x128xf32>
      %109 = arith.addf %107, %108 : vector<1x128xf32>
      %c3_77 = arith.constant 3 : index
      %c0_78 = arith.constant 0 : index
      %c0_79 = arith.constant 0 : index
      %110 = vector.load %arg6[%c3_77, %c0_78, %c0_79] : memref<4x1x128xf32, #tpu.memory_space<vmem>>, vector<1x1x128xf32>
      %111 = vector.shape_cast %110 : vector<1x1x128xf32> to vector<1x128xf32>
      %112 = vector.shape_cast %109 : vector<1x128xf32> to vector<1x1x128xf32>
      tpu.vector_store %arg6[%c3_77, %c0_78, %c0_79], %112 {strides = array<i32>} : memref<4x1x128xf32, #tpu.memory_space<vmem>>, vector<1x1x128xf32>,
      %c3_i32_80 = arith.constant 3 : i32
      %113 = arith.addi %0, %c3_i32_80 : i32
      %114 = arith.index_cast %113 : i32 to index
      %115 = memref.load %arg1[%114] : memref<8xi32, #tpu.memory_space<smem>>
      %c3_i32_81 = arith.constant 3 : i32
      %c3_i32_82 = arith.constant 3 : i32
      %c0_i32_83 = arith.constant 0 : i32
      %c0_i32_84 = arith.constant 0 : i32
      %116 = tpu.memref_slice %arg6[%c3_i32_81, %c0_i32_83, %c0_i32_84] : memref<4x1x128xf32, #tpu.memory_space<vmem>> -> memref<1x1x128xf32, #tpu.memory_space<vmem>>
      %117 = tpu.memref_squeeze %116 : memref<1x1x128xf32, #tpu.memory_space<vmem>> -> memref<1x128xf32, #tpu.memory_space<vmem>>
      %c0_i32_85 = arith.constant 0 : i32
      %118 = tpu.memref_slice %arg4[%115, %c0_i32_85] : memref<16x128xf32, #tpu.memory_space<any>> -> memref<1x128xf32, #tpu.memory_space<any>>
      %119 = tpu.memref_slice %arg8[%c3_i32_82] : memref<4x!tpu.dma_semaphore, #tpu.memory_space<semaphore_mem>> -> memref<1x!tpu.dma_semaphore, #tpu.memory_space<semaphore_mem>>
      %120 = tpu.memref_squeeze %119 : memref<1x!tpu.dma_semaphore, #tpu.memory_space<semaphore_mem>> -> memref<!tpu.dma_semaphore, #tpu.memory_space<semaphore_mem>>
      tpu.enqueue_dma source(%117 : memref<1x128xf32, #tpu.memory_space<vmem>>) target(%118 : memref<1x128xf32, #tpu.memory_space<any>>) target_semaphore(%120 : memref<!tpu.dma_semaphore, #tpu.memory_space<semaphore_mem>>)
    } else {
    }
    %c3_i32_31 = arith.constant 3 : i32
    %48 = arith.addi %0, %c3_i32_31 : i32
    %c4_i32_32 = arith.constant 4 : i32
    %49 = arith.addi %48, %c4_i32_32 : i32
    %c8_i32_33 = arith.constant 8 : i32
    %50 = arith.cmpi slt, %49, %c8_i32_33 : i32
    %51 = arith.extui %50 : i1 to i32
    %c0_i32_34 = arith.constant 0 : i32
    %52 = arith.cmpi ne, %51, %c0_i32_34 : i32
    scf.if %52 {
      %c7_i32_68 = arith.constant 7 : i32
      %101 = arith.addi %0, %c7_i32_68 : i32
      %102 = arith.index_cast %101 : i32 to index
      %103 = memref.load %arg1[%102] : memref<8xi32, #tpu.memory_space<smem>>
      %c3_i32_69 = arith.constant 3 : i32
      %c3_i32_70 = arith.constant 3 : i32
      %c0_i32_71 = arith.constant 0 : i32
      %104 = tpu.memref_slice %arg4[%103, %c0_i32_71] : memref<16x128xf32, #tpu.memory_space<any>> -> memref<1x128xf32, #tpu.memory_space<any>>
      %c0_i32_72 = arith.constant 0 : i32
      %c0_i32_73 = arith.constant 0 : i32
      %105 = tpu.memref_slice %arg5[%c3_i32_69, %c0_i32_72, %c0_i32_73] : memref<4x1x128xf32, #tpu.memory_space<vmem>> -> memref<1x1x128xf32, #tpu.memory_space<vmem>>
      %106 = tpu.memref_squeeze %105 : memref<1x1x128xf32, #tpu.memory_space<vmem>> -> memref<1x128xf32, #tpu.memory_space<vmem>>
      %107 = tpu.memref_slice %arg7[%c3_i32_70] : memref<4x!tpu.dma_semaphore, #tpu.memory_space<semaphore_mem>> -> memref<1x!tpu.dma_semaphore, #tpu.memory_space<semaphore_mem>>
      %108 = tpu.memref_squeeze %107 : memref<1x!tpu.dma_semaphore, #tpu.memory_space<semaphore_mem>> -> memref<!tpu.dma_semaphore, #tpu.memory_space<semaphore_mem>>
      tpu.enqueue_dma source(%104 : memref<1x128xf32, #tpu.memory_space<any>>) target(%106 : memref<1x128xf32, #tpu.memory_space<vmem>>) target_semaphore(%108 : memref<!tpu.dma_semaphore, #tpu.memory_space<semaphore_mem>>)
    } else {
    }
    %c0_i32_35 = arith.constant 0 : i32
    %53 = arith.addi %0, %c0_i32_35 : i32
    %c8_i32_36 = arith.constant 8 : i32
    %54 = arith.cmpi slt, %53, %c8_i32_36 : i32
    %55 = arith.extui %54 : i1 to i32
    %c0_i32_37 = arith.constant 0 : i32
    %56 = arith.cmpi ne, %55, %c0_i32_37 : i32
    scf.if %56 {
      %c0_i32_68 = arith.constant 0 : i32
      %c0_i32_69 = arith.constant 0 : i32
      %c0_i32_70 = arith.constant 0 : i32
      %c0_i32_71 = arith.constant 0 : i32
      %101 = tpu.memref_slice %arg6[%c0_i32_68, %c0_i32_70, %c0_i32_71] : memref<4x1x128xf32, #tpu.memory_space<vmem>> -> memref<1x1x128xf32, #tpu.memory_space<vmem>>
      %102 = tpu.memref_squeeze %101 : memref<1x1x128xf32, #tpu.memory_space<vmem>> -> memref<1x128xf32, #tpu.memory_space<vmem>>
      %c0_i32_72 = arith.constant 0 : i32
      %c0_i32_73 = arith.constant 0 : i32
      %103 = tpu.memref_slice %arg4[%c0_i32_72, %c0_i32_73] : memref<16x128xf32, #tpu.memory_space<any>> -> memref<1x128xf32, #tpu.memory_space<any>>
      %104 = tpu.memref_slice %arg8[%c0_i32_69] : memref<4x!tpu.dma_semaphore, #tpu.memory_space<semaphore_mem>> -> memref<1x!tpu.dma_semaphore, #tpu.memory_space<semaphore_mem>>
      %105 = tpu.memref_squeeze %104 : memref<1x!tpu.dma_semaphore, #tpu.memory_space<semaphore_mem>> -> memref<!tpu.dma_semaphore, #tpu.memory_space<semaphore_mem>>
      tpu.wait_dma2 semaphore(%105 : memref<!tpu.dma_semaphore, #tpu.memory_space<semaphore_mem>>) src(%102 : memref<1x128xf32, #tpu.memory_space<vmem>>) dst(%103 : memref<1x128xf32, #tpu.memory_space<any>>)
    } else {
    }
    %c4_i32_38 = arith.constant 4 : i32
    %57 = arith.addi %0, %c4_i32_38 : i32
    %c8_i32_39 = arith.constant 8 : i32
    %58 = arith.cmpi slt, %57, %c8_i32_39 : i32
    %59 = arith.extui %58 : i1 to i32
    %c0_i32_40 = arith.constant 0 : i32
    %60 = arith.cmpi ne, %59, %c0_i32_40 : i32
    scf.if %60 {
      %c0_i32_68 = arith.constant 0 : i32
      %c0_i32_69 = arith.constant 0 : i32
      %c0_i32_70 = arith.constant 0 : i32
      %c0_i32_71 = arith.constant 0 : i32
      %101 = tpu.memref_slice %arg4[%c0_i32_70, %c0_i32_71] : memref<16x128xf32, #tpu.memory_space<any>> -> memref<1x128xf32, #tpu.memory_space<any>>
      %c0_i32_72 = arith.constant 0 : i32
      %c0_i32_73 = arith.constant 0 : i32
      %102 = tpu.memref_slice %arg5[%c0_i32_68, %c0_i32_72, %c0_i32_73] : memref<4x1x128xf32, #tpu.memory_space<vmem>> -> memref<1x1x128xf32, #tpu.memory_space<vmem>>
      %103 = tpu.memref_squeeze %102 : memref<1x1x128xf32, #tpu.memory_space<vmem>> -> memref<1x128xf32, #tpu.memory_space<vmem>>
      %104 = tpu.memref_slice %arg7[%c0_i32_69] : memref<4x!tpu.dma_semaphore, #tpu.memory_space<semaphore_mem>> -> memref<1x!tpu.dma_semaphore, #tpu.memory_space<semaphore_mem>>
      %105 = tpu.memref_squeeze %104 : memref<1x!tpu.dma_semaphore, #tpu.memory_space<semaphore_mem>> -> memref<!tpu.dma_semaphore, #tpu.memory_space<semaphore_mem>>
      tpu.wait_dma2 semaphore(%105 : memref<!tpu.dma_semaphore, #tpu.memory_space<semaphore_mem>>) src(%101 : memref<1x128xf32, #tpu.memory_space<any>>) dst(%103 : memref<1x128xf32, #tpu.memory_space<vmem>>)
      %c0 = arith.constant 0 : index
      %c0_74 = arith.constant 0 : index
      %c0_75 = arith.constant 0 : index
      %106 = vector.load %arg5[%c0, %c0_74, %c0_75] : memref<4x1x128xf32, #tpu.memory_space<vmem>>, vector<1x1x128xf32>
      %107 = vector.shape_cast %106 : vector<1x1x128xf32> to vector<1x128xf32>
      %c4 = arith.constant 4 : index
      %c0_76 = arith.constant 0 : index
      %108 = vector.load %arg2[%c4, %c0_76] : memref<8x128xf32, #tpu.memory_space<vmem>>, vector<1x128xf32>
      %109 = arith.addf %107, %108 : vector<1x128xf32>
      %c0_77 = arith.constant 0 : index
      %c0_78 = arith.constant 0 : index
      %c0_79 = arith.constant 0 : index
      %110 = vector.load %arg6[%c0_77, %c0_78, %c0_79] : memref<4x1x128xf32, #tpu.memory_space<vmem>>, vector<1x1x128xf32>
      %111 = vector.shape_cast %110 : vector<1x1x128xf32> to vector<1x128xf32>
      %112 = vector.shape_cast %109 : vector<1x128xf32> to vector<1x1x128xf32>
      tpu.vector_store %arg6[%c0_77, %c0_78, %c0_79], %112 {strides = array<i32>} : memref<4x1x128xf32, #tpu.memory_space<vmem>>, vector<1x1x128xf32>,
      %c4_i32_80 = arith.constant 4 : i32
      %113 = arith.addi %0, %c4_i32_80 : i32
      %114 = arith.index_cast %113 : i32 to index
      %115 = memref.load %arg1[%114] : memref<8xi32, #tpu.memory_space<smem>>
      %c0_i32_81 = arith.constant 0 : i32
      %c0_i32_82 = arith.constant 0 : i32
      %c0_i32_83 = arith.constant 0 : i32
      %c0_i32_84 = arith.constant 0 : i32
      %116 = tpu.memref_slice %arg6[%c0_i32_81, %c0_i32_83, %c0_i32_84] : memref<4x1x128xf32, #tpu.memory_space<vmem>> -> memref<1x1x128xf32, #tpu.memory_space<vmem>>
      %117 = tpu.memref_squeeze %116 : memref<1x1x128xf32, #tpu.memory_space<vmem>> -> memref<1x128xf32, #tpu.memory_space<vmem>>
      %c0_i32_85 = arith.constant 0 : i32
      %118 = tpu.memref_slice %arg4[%115, %c0_i32_85] : memref<16x128xf32, #tpu.memory_space<any>> -> memref<1x128xf32, #tpu.memory_space<any>>
      %119 = tpu.memref_slice %arg8[%c0_i32_82] : memref<4x!tpu.dma_semaphore, #tpu.memory_space<semaphore_mem>> -> memref<1x!tpu.dma_semaphore, #tpu.memory_space<semaphore_mem>>
      %120 = tpu.memref_squeeze %119 : memref<1x!tpu.dma_semaphore, #tpu.memory_space<semaphore_mem>> -> memref<!tpu.dma_semaphore, #tpu.memory_space<semaphore_mem>>
      tpu.enqueue_dma source(%117 : memref<1x128xf32, #tpu.memory_space<vmem>>) target(%118 : memref<1x128xf32, #tpu.memory_space<any>>) target_semaphore(%120 : memref<!tpu.dma_semaphore, #tpu.memory_space<semaphore_mem>>)
    } else {
    }
    %c1_i32_41 = arith.constant 1 : i32
    %61 = arith.addi %0, %c1_i32_41 : i32
    %c8_i32_42 = arith.constant 8 : i32
    %62 = arith.cmpi slt, %61, %c8_i32_42 : i32
    %63 = arith.extui %62 : i1 to i32
    %c0_i32_43 = arith.constant 0 : i32
    %64 = arith.cmpi ne, %63, %c0_i32_43 : i32
    scf.if %64 {
      %c1_i32_68 = arith.constant 1 : i32
      %c1_i32_69 = arith.constant 1 : i32
      %c0_i32_70 = arith.constant 0 : i32
      %c0_i32_71 = arith.constant 0 : i32
      %101 = tpu.memref_slice %arg6[%c1_i32_68, %c0_i32_70, %c0_i32_71] : memref<4x1x128xf32, #tpu.memory_space<vmem>> -> memref<1x1x128xf32, #tpu.memory_space<vmem>>
      %102 = tpu.memref_squeeze %101 : memref<1x1x128xf32, #tpu.memory_space<vmem>> -> memref<1x128xf32, #tpu.memory_space<vmem>>
      %c0_i32_72 = arith.constant 0 : i32
      %c0_i32_73 = arith.constant 0 : i32
      %103 = tpu.memref_slice %arg4[%c0_i32_72, %c0_i32_73] : memref<16x128xf32, #tpu.memory_space<any>> -> memref<1x128xf32, #tpu.memory_space<any>>
      %104 = tpu.memref_slice %arg8[%c1_i32_69] : memref<4x!tpu.dma_semaphore, #tpu.memory_space<semaphore_mem>> -> memref<1x!tpu.dma_semaphore, #tpu.memory_space<semaphore_mem>>
      %105 = tpu.memref_squeeze %104 : memref<1x!tpu.dma_semaphore, #tpu.memory_space<semaphore_mem>> -> memref<!tpu.dma_semaphore, #tpu.memory_space<semaphore_mem>>
      tpu.wait_dma2 semaphore(%105 : memref<!tpu.dma_semaphore, #tpu.memory_space<semaphore_mem>>) src(%102 : memref<1x128xf32, #tpu.memory_space<vmem>>) dst(%103 : memref<1x128xf32, #tpu.memory_space<any>>)
    } else {
    }
    %c5_i32 = arith.constant 5 : i32
    %65 = arith.addi %0, %c5_i32 : i32
    %c8_i32_44 = arith.constant 8 : i32
    %66 = arith.cmpi slt, %65, %c8_i32_44 : i32
    %67 = arith.extui %66 : i1 to i32
    %c0_i32_45 = arith.constant 0 : i32
    %68 = arith.cmpi ne, %67, %c0_i32_45 : i32
    scf.if %68 {
      %c1_i32_68 = arith.constant 1 : i32
      %c1_i32_69 = arith.constant 1 : i32
      %c0_i32_70 = arith.constant 0 : i32
      %c0_i32_71 = arith.constant 0 : i32
      %101 = tpu.memref_slice %arg4[%c0_i32_70, %c0_i32_71] : memref<16x128xf32, #tpu.memory_space<any>> -> memref<1x128xf32, #tpu.memory_space<any>>
      %c0_i32_72 = arith.constant 0 : i32
      %c0_i32_73 = arith.constant 0 : i32
      %102 = tpu.memref_slice %arg5[%c1_i32_68, %c0_i32_72, %c0_i32_73] : memref<4x1x128xf32, #tpu.memory_space<vmem>> -> memref<1x1x128xf32, #tpu.memory_space<vmem>>
      %103 = tpu.memref_squeeze %102 : memref<1x1x128xf32, #tpu.memory_space<vmem>> -> memref<1x128xf32, #tpu.memory_space<vmem>>
      %104 = tpu.memref_slice %arg7[%c1_i32_69] : memref<4x!tpu.dma_semaphore, #tpu.memory_space<semaphore_mem>> -> memref<1x!tpu.dma_semaphore, #tpu.memory_space<semaphore_mem>>
      %105 = tpu.memref_squeeze %104 : memref<1x!tpu.dma_semaphore, #tpu.memory_space<semaphore_mem>> -> memref<!tpu.dma_semaphore, #tpu.memory_space<semaphore_mem>>
      tpu.wait_dma2 semaphore(%105 : memref<!tpu.dma_semaphore, #tpu.memory_space<semaphore_mem>>) src(%101 : memref<1x128xf32, #tpu.memory_space<any>>) dst(%103 : memref<1x128xf32, #tpu.memory_space<vmem>>)
      %c1 = arith.constant 1 : index
      %c0 = arith.constant 0 : index
      %c0_74 = arith.constant 0 : index
      %106 = vector.load %arg5[%c1, %c0, %c0_74] : memref<4x1x128xf32, #tpu.memory_space<vmem>>, vector<1x1x128xf32>
      %107 = vector.shape_cast %106 : vector<1x1x128xf32> to vector<1x128xf32>
      %c5 = arith.constant 5 : index
      %c0_75 = arith.constant 0 : index
      %108 = vector.load %arg2[%c5, %c0_75] : memref<8x128xf32, #tpu.memory_space<vmem>>, vector<1x128xf32>
      %109 = arith.addf %107, %108 : vector<1x128xf32>
      %c1_76 = arith.constant 1 : index
      %c0_77 = arith.constant 0 : index
      %c0_78 = arith.constant 0 : index
      %110 = vector.load %arg6[%c1_76, %c0_77, %c0_78] : memref<4x1x128xf32, #tpu.memory_space<vmem>>, vector<1x1x128xf32>
      %111 = vector.shape_cast %110 : vector<1x1x128xf32> to vector<1x128xf32>
      %112 = vector.shape_cast %109 : vector<1x128xf32> to vector<1x1x128xf32>
      tpu.vector_store %arg6[%c1_76, %c0_77, %c0_78], %112 {strides = array<i32>} : memref<4x1x128xf32, #tpu.memory_space<vmem>>, vector<1x1x128xf32>,
      %c5_i32_79 = arith.constant 5 : i32
      %113 = arith.addi %0, %c5_i32_79 : i32
      %114 = arith.index_cast %113 : i32 to index
      %115 = memref.load %arg1[%114] : memref<8xi32, #tpu.memory_space<smem>>
      %c1_i32_80 = arith.constant 1 : i32
      %c1_i32_81 = arith.constant 1 : i32
      %c0_i32_82 = arith.constant 0 : i32
      %c0_i32_83 = arith.constant 0 : i32
      %116 = tpu.memref_slice %arg6[%c1_i32_80, %c0_i32_82, %c0_i32_83] : memref<4x1x128xf32, #tpu.memory_space<vmem>> -> memref<1x1x128xf32, #tpu.memory_space<vmem>>
      %117 = tpu.memref_squeeze %116 : memref<1x1x128xf32, #tpu.memory_space<vmem>> -> memref<1x128xf32, #tpu.memory_space<vmem>>
      %c0_i32_84 = arith.constant 0 : i32
      %118 = tpu.memref_slice %arg4[%115, %c0_i32_84] : memref<16x128xf32, #tpu.memory_space<any>> -> memref<1x128xf32, #tpu.memory_space<any>>
      %119 = tpu.memref_slice %arg8[%c1_i32_81] : memref<4x!tpu.dma_semaphore, #tpu.memory_space<semaphore_mem>> -> memref<1x!tpu.dma_semaphore, #tpu.memory_space<semaphore_mem>>
      %120 = tpu.memref_squeeze %119 : memref<1x!tpu.dma_semaphore, #tpu.memory_space<semaphore_mem>> -> memref<!tpu.dma_semaphore, #tpu.memory_space<semaphore_mem>>
      tpu.enqueue_dma source(%117 : memref<1x128xf32, #tpu.memory_space<vmem>>) target(%118 : memref<1x128xf32, #tpu.memory_space<any>>) target_semaphore(%120 : memref<!tpu.dma_semaphore, #tpu.memory_space<semaphore_mem>>)
    } else {
    }
    %c2_i32_46 = arith.constant 2 : i32
    %69 = arith.addi %0, %c2_i32_46 : i32
    %c8_i32_47 = arith.constant 8 : i32
    %70 = arith.cmpi slt, %69, %c8_i32_47 : i32
    %71 = arith.extui %70 : i1 to i32
    %c0_i32_48 = arith.constant 0 : i32
    %72 = arith.cmpi ne, %71, %c0_i32_48 : i32
    scf.if %72 {
      %c2_i32_68 = arith.constant 2 : i32
      %c2_i32_69 = arith.constant 2 : i32
      %c0_i32_70 = arith.constant 0 : i32
      %c0_i32_71 = arith.constant 0 : i32
      %101 = tpu.memref_slice %arg6[%c2_i32_68, %c0_i32_70, %c0_i32_71] : memref<4x1x128xf32, #tpu.memory_space<vmem>> -> memref<1x1x128xf32, #tpu.memory_space<vmem>>
      %102 = tpu.memref_squeeze %101 : memref<1x1x128xf32, #tpu.memory_space<vmem>> -> memref<1x128xf32, #tpu.memory_space<vmem>>
      %c0_i32_72 = arith.constant 0 : i32
      %c0_i32_73 = arith.constant 0 : i32
      %103 = tpu.memref_slice %arg4[%c0_i32_72, %c0_i32_73] : memref<16x128xf32, #tpu.memory_space<any>> -> memref<1x128xf32, #tpu.memory_space<any>>
      %104 = tpu.memref_slice %arg8[%c2_i32_69] : memref<4x!tpu.dma_semaphore, #tpu.memory_space<semaphore_mem>> -> memref<1x!tpu.dma_semaphore, #tpu.memory_space<semaphore_mem>>
      %105 = tpu.memref_squeeze %104 : memref<1x!tpu.dma_semaphore, #tpu.memory_space<semaphore_mem>> -> memref<!tpu.dma_semaphore, #tpu.memory_space<semaphore_mem>>
      tpu.wait_dma2 semaphore(%105 : memref<!tpu.dma_semaphore, #tpu.memory_space<semaphore_mem>>) src(%102 : memref<1x128xf32, #tpu.memory_space<vmem>>) dst(%103 : memref<1x128xf32, #tpu.memory_space<any>>)
    } else {
    }
    %c6_i32 = arith.constant 6 : i32
    %73 = arith.addi %0, %c6_i32 : i32
    %c8_i32_49 = arith.constant 8 : i32
    %74 = arith.cmpi slt, %73, %c8_i32_49 : i32
    %75 = arith.extui %74 : i1 to i32
    %c0_i32_50 = arith.constant 0 : i32
    %76 = arith.cmpi ne, %75, %c0_i32_50 : i32
    scf.if %76 {
      %c2_i32_68 = arith.constant 2 : i32
      %c2_i32_69 = arith.constant 2 : i32
      %c0_i32_70 = arith.constant 0 : i32
      %c0_i32_71 = arith.constant 0 : i32
      %101 = tpu.memref_slice %arg4[%c0_i32_70, %c0_i32_71] : memref<16x128xf32, #tpu.memory_space<any>> -> memref<1x128xf32, #tpu.memory_space<any>>
      %c0_i32_72 = arith.constant 0 : i32
      %c0_i32_73 = arith.constant 0 : i32
      %102 = tpu.memref_slice %arg5[%c2_i32_68, %c0_i32_72, %c0_i32_73] : memref<4x1x128xf32, #tpu.memory_space<vmem>> -> memref<1x1x128xf32, #tpu.memory_space<vmem>>
      %103 = tpu.memref_squeeze %102 : memref<1x1x128xf32, #tpu.memory_space<vmem>> -> memref<1x128xf32, #tpu.memory_space<vmem>>
      %104 = tpu.memref_slice %arg7[%c2_i32_69] : memref<4x!tpu.dma_semaphore, #tpu.memory_space<semaphore_mem>> -> memref<1x!tpu.dma_semaphore, #tpu.memory_space<semaphore_mem>>
      %105 = tpu.memref_squeeze %104 : memref<1x!tpu.dma_semaphore, #tpu.memory_space<semaphore_mem>> -> memref<!tpu.dma_semaphore, #tpu.memory_space<semaphore_mem>>
      tpu.wait_dma2 semaphore(%105 : memref<!tpu.dma_semaphore, #tpu.memory_space<semaphore_mem>>) src(%101 : memref<1x128xf32, #tpu.memory_space<any>>) dst(%103 : memref<1x128xf32, #tpu.memory_space<vmem>>)
      %c2 = arith.constant 2 : index
      %c0 = arith.constant 0 : index
      %c0_74 = arith.constant 0 : index
      %106 = vector.load %arg5[%c2, %c0, %c0_74] : memref<4x1x128xf32, #tpu.memory_space<vmem>>, vector<1x1x128xf32>
      %107 = vector.shape_cast %106 : vector<1x1x128xf32> to vector<1x128xf32>
      %c6 = arith.constant 6 : index
      %c0_75 = arith.constant 0 : index
      %108 = vector.load %arg2[%c6, %c0_75] : memref<8x128xf32, #tpu.memory_space<vmem>>, vector<1x128xf32>
      %109 = arith.addf %107, %108 : vector<1x128xf32>
      %c2_76 = arith.constant 2 : index
      %c0_77 = arith.constant 0 : index
      %c0_78 = arith.constant 0 : index
      %110 = vector.load %arg6[%c2_76, %c0_77, %c0_78] : memref<4x1x128xf32, #tpu.memory_space<vmem>>, vector<1x1x128xf32>
      %111 = vector.shape_cast %110 : vector<1x1x128xf32> to vector<1x128xf32>
      %112 = vector.shape_cast %109 : vector<1x128xf32> to vector<1x1x128xf32>
      tpu.vector_store %arg6[%c2_76, %c0_77, %c0_78], %112 {strides = array<i32>} : memref<4x1x128xf32, #tpu.memory_space<vmem>>, vector<1x1x128xf32>,
      %c6_i32_79 = arith.constant 6 : i32
      %113 = arith.addi %0, %c6_i32_79 : i32
      %114 = arith.index_cast %113 : i32 to index
      %115 = memref.load %arg1[%114] : memref<8xi32, #tpu.memory_space<smem>>
      %c2_i32_80 = arith.constant 2 : i32
      %c2_i32_81 = arith.constant 2 : i32
      %c0_i32_82 = arith.constant 0 : i32
      %c0_i32_83 = arith.constant 0 : i32
      %116 = tpu.memref_slice %arg6[%c2_i32_80, %c0_i32_82, %c0_i32_83] : memref<4x1x128xf32, #tpu.memory_space<vmem>> -> memref<1x1x128xf32, #tpu.memory_space<vmem>>
      %117 = tpu.memref_squeeze %116 : memref<1x1x128xf32, #tpu.memory_space<vmem>> -> memref<1x128xf32, #tpu.memory_space<vmem>>
      %c0_i32_84 = arith.constant 0 : i32
      %118 = tpu.memref_slice %arg4[%115, %c0_i32_84] : memref<16x128xf32, #tpu.memory_space<any>> -> memref<1x128xf32, #tpu.memory_space<any>>
      %119 = tpu.memref_slice %arg8[%c2_i32_81] : memref<4x!tpu.dma_semaphore, #tpu.memory_space<semaphore_mem>> -> memref<1x!tpu.dma_semaphore, #tpu.memory_space<semaphore_mem>>
      %120 = tpu.memref_squeeze %119 : memref<1x!tpu.dma_semaphore, #tpu.memory_space<semaphore_mem>> -> memref<!tpu.dma_semaphore, #tpu.memory_space<semaphore_mem>>
      tpu.enqueue_dma source(%117 : memref<1x128xf32, #tpu.memory_space<vmem>>) target(%118 : memref<1x128xf32, #tpu.memory_space<any>>) target_semaphore(%120 : memref<!tpu.dma_semaphore, #tpu.memory_space<semaphore_mem>>)
    } else {
    }
    %c3_i32_51 = arith.constant 3 : i32
    %77 = arith.addi %0, %c3_i32_51 : i32
    %c8_i32_52 = arith.constant 8 : i32
    %78 = arith.cmpi slt, %77, %c8_i32_52 : i32
    %79 = arith.extui %78 : i1 to i32
    %c0_i32_53 = arith.constant 0 : i32
    %80 = arith.cmpi ne, %79, %c0_i32_53 : i32
    scf.if %80 {
      %c3_i32_68 = arith.constant 3 : i32
      %c3_i32_69 = arith.constant 3 : i32
      %c0_i32_70 = arith.constant 0 : i32
      %c0_i32_71 = arith.constant 0 : i32
      %101 = tpu.memref_slice %arg6[%c3_i32_68, %c0_i32_70, %c0_i32_71] : memref<4x1x128xf32, #tpu.memory_space<vmem>> -> memref<1x1x128xf32, #tpu.memory_space<vmem>>
      %102 = tpu.memref_squeeze %101 : memref<1x1x128xf32, #tpu.memory_space<vmem>> -> memref<1x128xf32, #tpu.memory_space<vmem>>
      %c0_i32_72 = arith.constant 0 : i32
      %c0_i32_73 = arith.constant 0 : i32
      %103 = tpu.memref_slice %arg4[%c0_i32_72, %c0_i32_73] : memref<16x128xf32, #tpu.memory_space<any>> -> memref<1x128xf32, #tpu.memory_space<any>>
      %104 = tpu.memref_slice %arg8[%c3_i32_69] : memref<4x!tpu.dma_semaphore, #tpu.memory_space<semaphore_mem>> -> memref<1x!tpu.dma_semaphore, #tpu.memory_space<semaphore_mem>>
      %105 = tpu.memref_squeeze %104 : memref<1x!tpu.dma_semaphore, #tpu.memory_space<semaphore_mem>> -> memref<!tpu.dma_semaphore, #tpu.memory_space<semaphore_mem>>
      tpu.wait_dma2 semaphore(%105 : memref<!tpu.dma_semaphore, #tpu.memory_space<semaphore_mem>>) src(%102 : memref<1x128xf32, #tpu.memory_space<vmem>>) dst(%103 : memref<1x128xf32, #tpu.memory_space<any>>)
    } else {
    }
    %c7_i32 = arith.constant 7 : i32
    %81 = arith.addi %0, %c7_i32 : i32
    %c8_i32_54 = arith.constant 8 : i32
    %82 = arith.cmpi slt, %81, %c8_i32_54 : i32
    %83 = arith.extui %82 : i1 to i32
    %c0_i32_55 = arith.constant 0 : i32
    %84 = arith.cmpi ne, %83, %c0_i32_55 : i32
    scf.if %84 {
      %c3_i32_68 = arith.constant 3 : i32
      %c3_i32_69 = arith.constant 3 : i32
      %c0_i32_70 = arith.constant 0 : i32
      %c0_i32_71 = arith.constant 0 : i32
      %101 = tpu.memref_slice %arg4[%c0_i32_70, %c0_i32_71] : memref<16x128xf32, #tpu.memory_space<any>> -> memref<1x128xf32, #tpu.memory_space<any>>
      %c0_i32_72 = arith.constant 0 : i32
      %c0_i32_73 = arith.constant 0 : i32
      %102 = tpu.memref_slice %arg5[%c3_i32_68, %c0_i32_72, %c0_i32_73] : memref<4x1x128xf32, #tpu.memory_space<vmem>> -> memref<1x1x128xf32, #tpu.memory_space<vmem>>
      %103 = tpu.memref_squeeze %102 : memref<1x1x128xf32, #tpu.memory_space<vmem>> -> memref<1x128xf32, #tpu.memory_space<vmem>>
      %104 = tpu.memref_slice %arg7[%c3_i32_69] : memref<4x!tpu.dma_semaphore, #tpu.memory_space<semaphore_mem>> -> memref<1x!tpu.dma_semaphore, #tpu.memory_space<semaphore_mem>>
      %105 = tpu.memref_squeeze %104 : memref<1x!tpu.dma_semaphore, #tpu.memory_space<semaphore_mem>> -> memref<!tpu.dma_semaphore, #tpu.memory_space<semaphore_mem>>
      tpu.wait_dma2 semaphore(%105 : memref<!tpu.dma_semaphore, #tpu.memory_space<semaphore_mem>>) src(%101 : memref<1x128xf32, #tpu.memory_space<any>>) dst(%103 : memref<1x128xf32, #tpu.memory_space<vmem>>)
      %c3 = arith.constant 3 : index
      %c0 = arith.constant 0 : index
      %c0_74 = arith.constant 0 : index
      %106 = vector.load %arg5[%c3, %c0, %c0_74] : memref<4x1x128xf32, #tpu.memory_space<vmem>>, vector<1x1x128xf32>
      %107 = vector.shape_cast %106 : vector<1x1x128xf32> to vector<1x128xf32>
      %c7 = arith.constant 7 : index
      %c0_75 = arith.constant 0 : index
      %108 = vector.load %arg2[%c7, %c0_75] : memref<8x128xf32, #tpu.memory_space<vmem>>, vector<1x128xf32>
      %109 = arith.addf %107, %108 : vector<1x128xf32>
      %c3_76 = arith.constant 3 : index
      %c0_77 = arith.constant 0 : index
      %c0_78 = arith.constant 0 : index
      %110 = vector.load %arg6[%c3_76, %c0_77, %c0_78] : memref<4x1x128xf32, #tpu.memory_space<vmem>>, vector<1x1x128xf32>
      %111 = vector.shape_cast %110 : vector<1x1x128xf32> to vector<1x128xf32>
      %112 = vector.shape_cast %109 : vector<1x128xf32> to vector<1x1x128xf32>
      tpu.vector_store %arg6[%c3_76, %c0_77, %c0_78], %112 {strides = array<i32>} : memref<4x1x128xf32, #tpu.memory_space<vmem>>, vector<1x1x128xf32>,
      %c7_i32_79 = arith.constant 7 : i32
      %113 = arith.addi %0, %c7_i32_79 : i32
      %114 = arith.index_cast %113 : i32 to index
      %115 = memref.load %arg1[%114] : memref<8xi32, #tpu.memory_space<smem>>
      %c3_i32_80 = arith.constant 3 : i32
      %c3_i32_81 = arith.constant 3 : i32
      %c0_i32_82 = arith.constant 0 : i32
      %c0_i32_83 = arith.constant 0 : i32
      %116 = tpu.memref_slice %arg6[%c3_i32_80, %c0_i32_82, %c0_i32_83] : memref<4x1x128xf32, #tpu.memory_space<vmem>> -> memref<1x1x128xf32, #tpu.memory_space<vmem>>
      %117 = tpu.memref_squeeze %116 : memref<1x1x128xf32, #tpu.memory_space<vmem>> -> memref<1x128xf32, #tpu.memory_space<vmem>>
      %c0_i32_84 = arith.constant 0 : i32
      %118 = tpu.memref_slice %arg4[%115, %c0_i32_84] : memref<16x128xf32, #tpu.memory_space<any>> -> memref<1x128xf32, #tpu.memory_space<any>>
      %119 = tpu.memref_slice %arg8[%c3_i32_81] : memref<4x!tpu.dma_semaphore, #tpu.memory_space<semaphore_mem>> -> memref<1x!tpu.dma_semaphore, #tpu.memory_space<semaphore_mem>>
      %120 = tpu.memref_squeeze %119 : memref<1x!tpu.dma_semaphore, #tpu.memory_space<semaphore_mem>> -> memref<!tpu.dma_semaphore, #tpu.memory_space<semaphore_mem>>
      tpu.enqueue_dma source(%117 : memref<1x128xf32, #tpu.memory_space<vmem>>) target(%118 : memref<1x128xf32, #tpu.memory_space<any>>) target_semaphore(%120 : memref<!tpu.dma_semaphore, #tpu.memory_space<semaphore_mem>>)
    } else {
    }
    %c4_i32_56 = arith.constant 4 : i32
    %85 = arith.addi %0, %c4_i32_56 : i32
    %c8_i32_57 = arith.constant 8 : i32
    %86 = arith.cmpi slt, %85, %c8_i32_57 : i32
    %87 = arith.extui %86 : i1 to i32
    %c0_i32_58 = arith.constant 0 : i32
    %88 = arith.cmpi ne, %87, %c0_i32_58 : i32
    scf.if %88 {
      %c0_i32_68 = arith.constant 0 : i32
      %c0_i32_69 = arith.constant 0 : i32
      %c0_i32_70 = arith.constant 0 : i32
      %c0_i32_71 = arith.constant 0 : i32
      %101 = tpu.memref_slice %arg6[%c0_i32_68, %c0_i32_70, %c0_i32_71] : memref<4x1x128xf32, #tpu.memory_space<vmem>> -> memref<1x1x128xf32, #tpu.memory_space<vmem>>
      %102 = tpu.memref_squeeze %101 : memref<1x1x128xf32, #tpu.memory_space<vmem>> -> memref<1x128xf32, #tpu.memory_space<vmem>>
      %c0_i32_72 = arith.constant 0 : i32
      %c0_i32_73 = arith.constant 0 : i32
      %103 = tpu.memref_slice %arg4[%c0_i32_72, %c0_i32_73] : memref<16x128xf32, #tpu.memory_space<any>> -> memref<1x128xf32, #tpu.memory_space<any>>
      %104 = tpu.memref_slice %arg8[%c0_i32_69] : memref<4x!tpu.dma_semaphore, #tpu.memory_space<semaphore_mem>> -> memref<1x!tpu.dma_semaphore, #tpu.memory_space<semaphore_mem>>
      %105 = tpu.memref_squeeze %104 : memref<1x!tpu.dma_semaphore, #tpu.memory_space<semaphore_mem>> -> memref<!tpu.dma_semaphore, #tpu.memory_space<semaphore_mem>>
      tpu.wait_dma2 semaphore(%105 : memref<!tpu.dma_semaphore, #tpu.memory_space<semaphore_mem>>) src(%102 : memref<1x128xf32, #tpu.memory_space<vmem>>) dst(%103 : memref<1x128xf32, #tpu.memory_space<any>>)
    } else {
    }
    %c5_i32_59 = arith.constant 5 : i32
    %89 = arith.addi %0, %c5_i32_59 : i32
    %c8_i32_60 = arith.constant 8 : i32
    %90 = arith.cmpi slt, %89, %c8_i32_60 : i32
    %91 = arith.extui %90 : i1 to i32
    %c0_i32_61 = arith.constant 0 : i32
    %92 = arith.cmpi ne, %91, %c0_i32_61 : i32
    scf.if %92 {
      %c1_i32_68 = arith.constant 1 : i32
      %c1_i32_69 = arith.constant 1 : i32
      %c0_i32_70 = arith.constant 0 : i32
      %c0_i32_71 = arith.constant 0 : i32
      %101 = tpu.memref_slice %arg6[%c1_i32_68, %c0_i32_70, %c0_i32_71] : memref<4x1x128xf32, #tpu.memory_space<vmem>> -> memref<1x1x128xf32, #tpu.memory_space<vmem>>
      %102 = tpu.memref_squeeze %101 : memref<1x1x128xf32, #tpu.memory_space<vmem>> -> memref<1x128xf32, #tpu.memory_space<vmem>>
      %c0_i32_72 = arith.constant 0 : i32
      %c0_i32_73 = arith.constant 0 : i32
      %103 = tpu.memref_slice %arg4[%c0_i32_72, %c0_i32_73] : memref<16x128xf32, #tpu.memory_space<any>> -> memref<1x128xf32, #tpu.memory_space<any>>
      %104 = tpu.memref_slice %arg8[%c1_i32_69] : memref<4x!tpu.dma_semaphore, #tpu.memory_space<semaphore_mem>> -> memref<1x!tpu.dma_semaphore, #tpu.memory_space<semaphore_mem>>
      %105 = tpu.memref_squeeze %104 : memref<1x!tpu.dma_semaphore, #tpu.memory_space<semaphore_mem>> -> memref<!tpu.dma_semaphore, #tpu.memory_space<semaphore_mem>>
      tpu.wait_dma2 semaphore(%105 : memref<!tpu.dma_semaphore, #tpu.memory_space<semaphore_mem>>) src(%102 : memref<1x128xf32, #tpu.memory_space<vmem>>) dst(%103 : memref<1x128xf32, #tpu.memory_space<any>>)
    } else {
    }
    %c6_i32_62 = arith.constant 6 : i32
    %93 = arith.addi %0, %c6_i32_62 : i32
    %c8_i32_63 = arith.constant 8 : i32
    %94 = arith.cmpi slt, %93, %c8_i32_63 : i32
    %95 = arith.extui %94 : i1 to i32
    %c0_i32_64 = arith.constant 0 : i32
    %96 = arith.cmpi ne, %95, %c0_i32_64 : i32
    scf.if %96 {
      %c2_i32_68 = arith.constant 2 : i32
      %c2_i32_69 = arith.constant 2 : i32
      %c0_i32_70 = arith.constant 0 : i32
      %c0_i32_71 = arith.constant 0 : i32
      %101 = tpu.memref_slice %arg6[%c2_i32_68, %c0_i32_70, %c0_i32_71] : memref<4x1x128xf32, #tpu.memory_space<vmem>> -> memref<1x1x128xf32, #tpu.memory_space<vmem>>
      %102 = tpu.memref_squeeze %101 : memref<1x1x128xf32, #tpu.memory_space<vmem>> -> memref<1x128xf32, #tpu.memory_space<vmem>>
      %c0_i32_72 = arith.constant 0 : i32
      %c0_i32_73 = arith.constant 0 : i32
      %103 = tpu.memref_slice %arg4[%c0_i32_72, %c0_i32_73] : memref<16x128xf32, #tpu.memory_space<any>> -> memref<1x128xf32, #tpu.memory_space<any>>
      %104 = tpu.memref_slice %arg8[%c2_i32_69] : memref<4x!tpu.dma_semaphore, #tpu.memory_space<semaphore_mem>> -> memref<1x!tpu.dma_semaphore, #tpu.memory_space<semaphore_mem>>
      %105 = tpu.memref_squeeze %104 : memref<1x!tpu.dma_semaphore, #tpu.memory_space<semaphore_mem>> -> memref<!tpu.dma_semaphore, #tpu.memory_space<semaphore_mem>>
      tpu.wait_dma2 semaphore(%105 : memref<!tpu.dma_semaphore, #tpu.memory_space<semaphore_mem>>) src(%102 : memref<1x128xf32, #tpu.memory_space<vmem>>) dst(%103 : memref<1x128xf32, #tpu.memory_space<any>>)
    } else {
    }
    %c7_i32_65 = arith.constant 7 : i32
    %97 = arith.addi %0, %c7_i32_65 : i32
    %c8_i32_66 = arith.constant 8 : i32
    %98 = arith.cmpi slt, %97, %c8_i32_66 : i32
    %99 = arith.extui %98 : i1 to i32
    %c0_i32_67 = arith.constant 0 : i32
    %100 = arith.cmpi ne, %99, %c0_i32_67 : i32
    scf.if %100 {
      %c3_i32_68 = arith.constant 3 : i32
      %c3_i32_69 = arith.constant 3 : i32
      %c0_i32_70 = arith.constant 0 : i32
      %c0_i32_71 = arith.constant 0 : i32
      %101 = tpu.memref_slice %arg6[%c3_i32_68, %c0_i32_70, %c0_i32_71] : memref<4x1x128xf32, #tpu.memory_space<vmem>> -> memref<1x1x128xf32, #tpu.memory_space<vmem>>
      %102 = tpu.memref_squeeze %101 : memref<1x1x128xf32, #tpu.memory_space<vmem>> -> memref<1x128xf32, #tpu.memory_space<vmem>>
      %c0_i32_72 = arith.constant 0 : i32
      %c0_i32_73 = arith.constant 0 : i32
      %103 = tpu.memref_slice %arg4[%c0_i32_72, %c0_i32_73] : memref<16x128xf32, #tpu.memory_space<any>> -> memref<1x128xf32, #tpu.memory_space<any>>
      %104 = tpu.memref_slice %arg8[%c3_i32_69] : memref<4x!tpu.dma_semaphore, #tpu.memory_space<semaphore_mem>> -> memref<1x!tpu.dma_semaphore, #tpu.memory_space<semaphore_mem>>
      %105 = tpu.memref_squeeze %104 : memref<1x!tpu.dma_semaphore, #tpu.memory_space<semaphore_mem>> -> memref<!tpu.dma_semaphore, #tpu.memory_space<semaphore_mem>>
      tpu.wait_dma2 semaphore(%105 : memref<!tpu.dma_semaphore, #tpu.memory_space<semaphore_mem>>) src(%102 : memref<1x128xf32, #tpu.memory_space<vmem>>) dst(%103 : memref<1x128xf32, #tpu.memory_space<any>>)
    } else {
    }
    return
  }
  func.func @transform_0(%arg0: i32, %arg1: memref<8xi32, #tpu.memory_space<smem>>) -> (i32, i32) {
    %c0_i32 = arith.constant 0 : i32
    %c0_i32_0 = arith.constant 0 : i32
    return %arg0, %c0_i32 : i32, i32
  }
}

</mosaic_0001>

<llo_original>
// kernel: unpool_layer.1
$region0: #{unpool_layer.1}
  #allocation0 [shape = 'u32[]', space=smem, size = 0x4, offset = 0x4, fixed_abs, tag = 'smem constant byte address 0x4 - core index']
  #allocation1 [shape = 'u32[144,128]{1,0:T(1,128)}', space=vmem, size = 0x12000, scoped, tag = 'internal scratch']
  #allocation2 [shape = 'f32[4,1,128]{2,1,0:T(1,128)}', space=vmem, size = 0x800, scoped, tag = 'scratch operand']
  #allocation3 [shape = 'f32[4,1,128]{2,1,0:T(1,128)}', space=vmem, size = 0x800, scoped, tag = 'scratch operand']
  #allocation4 [shape = 's32[4]{0}', space=sflag, size = 0x10, scoped, tag = 'scratch operand']
  #allocation5 [shape = 's32[4]{0}', space=sflag, size = 0x10, scoped, tag = 'scratch operand']
  #allocation6 [shape = 's32[1]{0}', space=sflag, size = 0x4, scoped, tag = 'scoped memory for unpool_layer.1']
  #allocation7 [shape = 'u8[512]{0}', space=smem, size = 0x200, scoped, tag = 'prefetched SMEM operand 0']
  #allocation8 [shape = 's32[]', space=sflag, size = 0x4, offset = 0, fixed_abs, tag = 'sflag constant byte address 0x0 - dummy sync flag']
  #allocation9 [shape = 's32[]', space=sflag, size = 0x4, offset = 0, fixed_abs, tag = 'sflag constant byte address 0x0 - dummy sync flag']
  #allocation10 [shape = 's32[]', space=sflag, size = 0x4, offset = 0, fixed_abs, tag = 'sflag constant byte address 0x0 - dummy sync flag']
  #allocation11 [shape = 's32[]', space=sflag, size = 0x4, offset = 0, fixed_abs, tag = 'sflag constant byte address 0x0 - dummy sync flag']
  #allocation12 [shape = 's32[]', space=sflag, size = 0x4, offset = 0, fixed_abs, tag = 'sflag constant byte address 0x0 - dummy sync flag']
  #allocation13 [shape = 's32[]', space=sflag, size = 0x4, offset = 0, fixed_abs, tag = 'sflag constant byte address 0x0 - dummy sync flag']
  #allocation14 [shape = 's32[]', space=sflag, size = 0x4, offset = 0, fixed_abs, tag = 'sflag constant byte address 0x0 - dummy sync flag']
  #allocation15 [shape = 's32[]', space=sflag, size = 0x4, offset = 0, fixed_abs, tag = 'sflag constant byte address 0x0 - dummy sync flag']
  #allocation16 [shape = 's32[]', space=sflag, size = 0x4, offset = 0, fixed_abs, tag = 'sflag constant byte address 0x0 - dummy sync flag']
  #allocation17 [shape = 's32[]', space=sflag, size = 0x4, offset = 0, fixed_abs, tag = 'sflag constant byte address 0x0 - dummy sync flag']
  #allocation18 [shape = 's32[]', space=sflag, size = 0x4, offset = 0, fixed_abs, tag = 'sflag constant byte address 0x0 - dummy sync flag']
  #allocation19 [shape = 's32[]', space=sflag, size = 0x4, offset = 0, fixed_abs, tag = 'sflag constant byte address 0x0 - dummy sync flag']
  #allocation20 [shape = 's32[]', space=sflag, size = 0x4, offset = 0, fixed_abs, tag = 'sflag constant byte address 0x0 - dummy sync flag']
  #allocation21 [shape = 's32[]', space=sflag, size = 0x4, offset = 0, fixed_abs, tag = 'sflag constant byte address 0x0 - dummy sync flag']
  #allocation22 [shape = 's32[]', space=sflag, size = 0x4, offset = 0, fixed_abs, tag = 'sflag constant byte address 0x0 - dummy sync flag']
  #allocation23 [shape = 's32[]', space=sflag, size = 0x4, offset = 0, fixed_abs, tag = 'sflag constant byte address 0x0 - dummy sync flag']
  %s0 = inlined_call_operand.vmem [shape: s32[8], index: 0, kind: input, shape index: {}]
  %s1 = inlined_call_operand.vmem [shape: f32[8,128], index: 1, kind: input, shape index: {}]
  %s2 = inlined_call_operand.vmem [shape: f32[16,128], index: 2, kind: input, shape index: {}, may-alias: {2,3}]
  %s3 = inlined_call_operand.vmem [shape: f32[16,128], index: 3, kind: output, shape index: {}, may-alias: {2,3}]
  %s4 = sld [smem:[#allocation0]]
  $region582: #{unpool_layer.1} parent=0
    _
  %s6 = ssub.s32 1, %s4
  %s7 = scalar_select 0, %s6, %s4
  %s8 = sshll.u32 %s0, 4
  %s9 = int_to_ptr.vmem [resolvable:$true] %s8
  %11 = dma.vmem_to_smem %s9, 16, [#allocation7], [#allocation6]
  %12 = dma.done [#allocation6], 16
  %13 = sfence
  // Predicated region
  $region2: #{unpool_layer.1} parent=0 // pred_check
    _
  $region3: #{unpool_layer.1} parent=0 // pred_check_branch
    %15 = sbr.rel (0) target = $region5
  $region4: #{unpool_layer.1} parent=0 // pred_region
    _
  $region5: #{unpool_layer.1} parent=0 // pred_fallthru
    _
  %s16 = smul.u32 0, 8
  %p17 = scmp.lt.s32.totalorder %s16, 8
  // Predicated region
  $region6: #{unpool_layer.1} parent=0 // pred_check
    %p18 = pneg %p17
  $region7: #{unpool_layer.1} parent=0 // pred_check_branch
    %20 = sbr.rel (%p18) target = $region9
  $region8: #{unpool_layer.1} parent=0 // pred_region
    %s21 = sld [smem:[#allocation7 + %s16]]
    %s22 = scalar_lea.vmem %s3, %s21
    %p24 = scmp.lt.u32.totalorder 1, 8
    %p25 = pneg %p24
    // Predicated region
    $region10: #{unpool_layer.1} parent=8 // pred_check
      _
    $region11: #{unpool_layer.1} parent=8 // pred_check_branch
      %27 = sbr.rel (%p24) target = $region13
    $region12: #{unpool_layer.1} parent=8 // pred_region
      %s42 = sand.u32 1, 7
      %p43 = scmp.eq.s32.totalorder %s42, 0
      %p44 = pneg %p43
      // Predicated region
      $region25: #{unpool_layer.1} parent=12 // pred_check
        _
      $region26: #{unpool_layer.1} parent=12 // pred_check_branch
        %46 = sbr.rel (%p43) target = $region28
      $region27: #{unpool_layer.1} parent=12 // pred_region
        %s47 = sand.u32 1, 7
        %s48 = ssub.s32 1, %s47
        %s49 = scalar_lea.vmem %s22, %s48
        %s50 = ssub.s32 1, %s47
        %s51 = scalar_lea.vmem [#allocation2], %s50
        %s52 = sshllo.u32 0, %s47
        loop: start=0, step=1, limit=1
        $region29: #{unpool_layer.1} parent=27 // loop_pre_header
          _
        $region30: #{unpool_layer.1} parent=27 // loop_header
          %s54 = sphi 0, %s58
          %p55 = scmp.ge.s32.totalorder %s54, 1
          %s59 = sphi %s49, %s49
          %s60 = sphi %s51, %s51
        $region31: #{unpool_layer.1} parent=27 // loop_header_branch
          %57 = sbr.rel (%p55) target = $region35
        $region32: #{unpool_layer.1} parent=27 // loop_body
          %v61 = vld [vmem:[%s59] sm:%s52]
          %62 = vst [vmem:[%s60] sm:%s52] %v61
        $region33: #{unpool_layer.1} parent=27 // loop_footer
          %s58 = sadd.s32 1, %s54
        $region34: #{unpool_layer.1} parent=27 // loop_footer_branch
          %53 = sbr.rel target = $region30
        $region35: #{unpool_layer.1} parent=27 // loop_exit
          _
      $region28: #{unpool_layer.1} parent=12 // pred_fallthru
        _
    $region13: #{unpool_layer.1} parent=8 // pred_fallthru
      _
    // Predicated region
    $region14: #{unpool_layer.1} parent=8 // pred_check
      %p28 = pneg %p24
    $region15: #{unpool_layer.1} parent=8 // pred_check_branch
      %30 = sbr.rel (%p28) target = $region17
    $region16: #{unpool_layer.1} parent=8 // pred_region
      %s31 = sshllo.u32 0, 1
      loop: start=0, step=1, limit=1
      $region18: #{unpool_layer.1} parent=16 // loop_pre_header
        _
      $region19: #{unpool_layer.1} parent=16 // loop_header
        %s33 = sphi 0, %s37
        %p34 = scmp.ge.s32.totalorder %s33, 1
        %s38 = sphi %s22, %s22
        %s39 = sphi [#allocation2], [#allocation2]
      $region20: #{unpool_layer.1} parent=16 // loop_header_branch
        %36 = sbr.rel (%p34) target = $region24
      $region21: #{unpool_layer.1} parent=16 // loop_body
        %v40 = vld [vmem:[%s38] sm:%s31]
        %41 = vst [vmem:[%s39] sm:%s31] %v40
      $region22: #{unpool_layer.1} parent=16 // loop_footer
        %s37 = sadd.s32 1, %s33
      $region23: #{unpool_layer.1} parent=16 // loop_footer_branch
        %32 = sbr.rel target = $region19
      $region24: #{unpool_layer.1} parent=16 // loop_exit
        _
    $region17: #{unpool_layer.1} parent=8 // pred_fallthru
      _
    // Predicated region
    $region36: #{unpool_layer.1} parent=8 // pred_check
      _
    $region37: #{unpool_layer.1} parent=8 // pred_check_branch
      %65 = sbr.rel (0) target = $region39
    $region38: #{unpool_layer.1} parent=8 // pred_region
      %66 = vsyncadd [#allocation4], 16
    $region39: #{unpool_layer.1} parent=8 // pred_fallthru
      _
  $region9: #{unpool_layer.1} parent=0 // pred_fallthru
    _
  %s67 = sadd.s32 %s16, 1
  %p68 = scmp.lt.s32.totalorder %s67, 8
  // Predicated region
  $region40: #{unpool_layer.1} parent=0 // pred_check
    %p69 = pneg %p68
  $region41: #{unpool_layer.1} parent=0 // pred_check_branch
    %71 = sbr.rel (%p69) target = $region43
  $region42: #{unpool_layer.1} parent=0 // pred_region
    %s72 = sld [smem:[#allocation7 + %s67]]
    %s73 = scalar_lea.vmem %s3, %s72
    %s74 = scalar_lea.vmem [#allocation2], 1
    %s75 = scalar_lea.sflag [#allocation4], 1
    %p77 = scmp.lt.u32.totalorder 1, 8
    %p78 = pneg %p77
    // Predicated region
    $region44: #{unpool_layer.1} parent=42 // pred_check
      _
    $region45: #{unpool_layer.1} parent=42 // pred_check_branch
      %80 = sbr.rel (%p77) target = $region47
    $region46: #{unpool_layer.1} parent=42 // pred_region
      %s95 = sand.u32 1, 7
      %p96 = scmp.eq.s32.totalorder %s95, 0
      %p97 = pneg %p96
      // Predicated region
      $region59: #{unpool_layer.1} parent=46 // pred_check
        _
      $region60: #{unpool_layer.1} parent=46 // pred_check_branch
        %99 = sbr.rel (%p96) target = $region62
      $region61: #{unpool_layer.1} parent=46 // pred_region
        %s100 = sand.u32 1, 7
        %s101 = ssub.s32 1, %s100
        %s102 = scalar_lea.vmem %s73, %s101
        %s103 = ssub.s32 1, %s100
        %s104 = scalar_lea.vmem %s74, %s103 [#allocation2]
        %s105 = sshllo.u32 0, %s100
        loop: start=0, step=1, limit=1
        $region63: #{unpool_layer.1} parent=61 // loop_pre_header
          _
        $region64: #{unpool_layer.1} parent=61 // loop_header
          %s107 = sphi 0, %s111
          %p108 = scmp.ge.s32.totalorder %s107, 1
          %s112 = sphi %s102, %s102
          %s113 = sphi %s104, %s104
        $region65: #{unpool_layer.1} parent=61 // loop_header_branch
          %110 = sbr.rel (%p108) target = $region69
        $region66: #{unpool_layer.1} parent=61 // loop_body
          %v114 = vld [vmem:[%s112] sm:%s105]
          %115 = vst [vmem:[%s113] sm:%s105] %v114
        $region67: #{unpool_layer.1} parent=61 // loop_footer
          %s111 = sadd.s32 1, %s107
        $region68: #{unpool_layer.1} parent=61 // loop_footer_branch
          %106 = sbr.rel target = $region64
        $region69: #{unpool_layer.1} parent=61 // loop_exit
          _
      $region62: #{unpool_layer.1} parent=46 // pred_fallthru
        _
    $region47: #{unpool_layer.1} parent=42 // pred_fallthru
      _
    // Predicated region
    $region48: #{unpool_layer.1} parent=42 // pred_check
      %p81 = pneg %p77
    $region49: #{unpool_layer.1} parent=42 // pred_check_branch
      %83 = sbr.rel (%p81) target = $region51
    $region50: #{unpool_layer.1} parent=42 // pred_region
      %s84 = sshllo.u32 0, 1
      loop: start=0, step=1, limit=1
      $region52: #{unpool_layer.1} parent=50 // loop_pre_header
        _
      $region53: #{unpool_layer.1} parent=50 // loop_header
        %s86 = sphi 0, %s90
        %p87 = scmp.ge.s32.totalorder %s86, 1
        %s91 = sphi %s73, %s73
        %s92 = sphi %s74, %s74
      $region54: #{unpool_layer.1} parent=50 // loop_header_branch
        %89 = sbr.rel (%p87) target = $region58
      $region55: #{unpool_layer.1} parent=50 // loop_body
        %v93 = vld [vmem:[%s91] sm:%s84]
        %94 = vst [vmem:[%s92] sm:%s84] %v93
      $region56: #{unpool_layer.1} parent=50 // loop_footer
        %s90 = sadd.s32 1, %s86
      $region57: #{unpool_layer.1} parent=50 // loop_footer_branch
        %85 = sbr.rel target = $region53
      $region58: #{unpool_layer.1} parent=50 // loop_exit
        _
    $region51: #{unpool_layer.1} parent=42 // pred_fallthru
      _
    // Predicated region
    $region70: #{unpool_layer.1} parent=42 // pred_check
      _
    $region71: #{unpool_layer.1} parent=42 // pred_check_branch
      %118 = sbr.rel (0) target = $region73
    $region72: #{unpool_layer.1} parent=42 // pred_region
      %119 = vsyncadd %s75, 16
    $region73: #{unpool_layer.1} parent=42 // pred_fallthru
      _
  $region43: #{unpool_layer.1} parent=0 // pred_fallthru
    _
  %s120 = sadd.s32 %s16, 2
  %p121 = scmp.lt.s32.totalorder %s120, 8
  // Predicated region
  $region74: #{unpool_layer.1} parent=0 // pred_check
    %p122 = pneg %p121
  $region75: #{unpool_layer.1} parent=0 // pred_check_branch
    %124 = sbr.rel (%p122) target = $region77
  $region76: #{unpool_layer.1} parent=0 // pred_region
    %s125 = sld [smem:[#allocation7 + %s120]]
    %s126 = scalar_lea.vmem %s3, %s125
    %s127 = scalar_lea.vmem [#allocation2], 2
    %s128 = scalar_lea.sflag [#allocation4], 2
    %p130 = scmp.lt.u32.totalorder 1, 8
    %p131 = pneg %p130
    // Predicated region
    $region78: #{unpool_layer.1} parent=76 // pred_check
      _
    $region79: #{unpool_layer.1} parent=76 // pred_check_branch
      %133 = sbr.rel (%p130) target = $region81
    $region80: #{unpool_layer.1} parent=76 // pred_region
      %s148 = sand.u32 1, 7
      %p149 = scmp.eq.s32.totalorder %s148, 0
      %p150 = pneg %p149
      // Predicated region
      $region93: #{unpool_layer.1} parent=80 // pred_check
        _
      $region94: #{unpool_layer.1} parent=80 // pred_check_branch
        %152 = sbr.rel (%p149) target = $region96
      $region95: #{unpool_layer.1} parent=80 // pred_region
        %s153 = sand.u32 1, 7
        %s154 = ssub.s32 1, %s153
        %s155 = scalar_lea.vmem %s126, %s154
        %s156 = ssub.s32 1, %s153
        %s157 = scalar_lea.vmem %s127, %s156 [#allocation2]
        %s158 = sshllo.u32 0, %s153
        loop: start=0, step=1, limit=1
        $region97: #{unpool_layer.1} parent=95 // loop_pre_header
          _
        $region98: #{unpool_layer.1} parent=95 // loop_header
          %s160 = sphi 0, %s164
          %p161 = scmp.ge.s32.totalorder %s160, 1
          %s165 = sphi %s155, %s155
          %s166 = sphi %s157, %s157
        $region99: #{unpool_layer.1} parent=95 // loop_header_branch
          %163 = sbr.rel (%p161) target = $region103
        $region100: #{unpool_layer.1} parent=95 // loop_body
          %v167 = vld [vmem:[%s165] sm:%s158]
          %168 = vst [vmem:[%s166] sm:%s158] %v167
        $region101: #{unpool_layer.1} parent=95 // loop_footer
          %s164 = sadd.s32 1, %s160
        $region102: #{unpool_layer.1} parent=95 // loop_footer_branch
          %159 = sbr.rel target = $region98
        $region103: #{unpool_layer.1} parent=95 // loop_exit
          _
      $region96: #{unpool_layer.1} parent=80 // pred_fallthru
        _
    $region81: #{unpool_layer.1} parent=76 // pred_fallthru
      _
    // Predicated region
    $region82: #{unpool_layer.1} parent=76 // pred_check
      %p134 = pneg %p130
    $region83: #{unpool_layer.1} parent=76 // pred_check_branch
      %136 = sbr.rel (%p134) target = $region85
    $region84: #{unpool_layer.1} parent=76 // pred_region
      %s137 = sshllo.u32 0, 1
      loop: start=0, step=1, limit=1
      $region86: #{unpool_layer.1} parent=84 // loop_pre_header
        _
      $region87: #{unpool_layer.1} parent=84 // loop_header
        %s139 = sphi 0, %s143
        %p140 = scmp.ge.s32.totalorder %s139, 1
        %s144 = sphi %s126, %s126
        %s145 = sphi %s127, %s127
      $region88: #{unpool_layer.1} parent=84 // loop_header_branch
        %142 = sbr.rel (%p140) target = $region92
      $region89: #{unpool_layer.1} parent=84 // loop_body
        %v146 = vld [vmem:[%s144] sm:%s137]
        %147 = vst [vmem:[%s145] sm:%s137] %v146
      $region90: #{unpool_layer.1} parent=84 // loop_footer
        %s143 = sadd.s32 1, %s139
      $region91: #{unpool_layer.1} parent=84 // loop_footer_branch
        %138 = sbr.rel target = $region87
      $region92: #{unpool_layer.1} parent=84 // loop_exit
        _
    $region85: #{unpool_layer.1} parent=76 // pred_fallthru
      _
    // Predicated region
    $region104: #{unpool_layer.1} parent=76 // pred_check
      _
    $region105: #{unpool_layer.1} parent=76 // pred_check_branch
      %171 = sbr.rel (0) target = $region107
    $region106: #{unpool_layer.1} parent=76 // pred_region
      %172 = vsyncadd %s128, 16
    $region107: #{unpool_layer.1} parent=76 // pred_fallthru
      _
  $region77: #{unpool_layer.1} parent=0 // pred_fallthru
    _
  %s173 = sadd.s32 %s16, 3
  %p174 = scmp.lt.s32.totalorder %s173, 8
  // Predicated region
  $region108: #{unpool_layer.1} parent=0 // pred_check
    %p175 = pneg %p174
  $region109: #{unpool_layer.1} parent=0 // pred_check_branch
    %177 = sbr.rel (%p175) target = $region111
  $region110: #{unpool_layer.1} parent=0 // pred_region
    %s178 = sld [smem:[#allocation7 + %s173]]
    %s179 = scalar_lea.vmem %s3, %s178
    %s180 = scalar_lea.vmem [#allocation2], 3
    %s181 = scalar_lea.sflag [#allocation4], 3
    %p183 = scmp.lt.u32.totalorder 1, 8
    %p184 = pneg %p183
    // Predicated region
    $region112: #{unpool_layer.1} parent=110 // pred_check
      _
    $region113: #{unpool_layer.1} parent=110 // pred_check_branch
      %186 = sbr.rel (%p183) target = $region115
    $region114: #{unpool_layer.1} parent=110 // pred_region
      %s201 = sand.u32 1, 7
      %p202 = scmp.eq.s32.totalorder %s201, 0
      %p203 = pneg %p202
      // Predicated region
      $region127: #{unpool_layer.1} parent=114 // pred_check
        _
      $region128: #{unpool_layer.1} parent=114 // pred_check_branch
        %205 = sbr.rel (%p202) target = $region130
      $region129: #{unpool_layer.1} parent=114 // pred_region
        %s206 = sand.u32 1, 7
        %s207 = ssub.s32 1, %s206
        %s208 = scalar_lea.vmem %s179, %s207
        %s209 = ssub.s32 1, %s206
        %s210 = scalar_lea.vmem %s180, %s209 [#allocation2]
        %s211 = sshllo.u32 0, %s206
        loop: start=0, step=1, limit=1
        $region131: #{unpool_layer.1} parent=129 // loop_pre_header
          _
        $region132: #{unpool_layer.1} parent=129 // loop_header
          %s213 = sphi 0, %s217
          %p214 = scmp.ge.s32.totalorder %s213, 1
          %s218 = sphi %s208, %s208
          %s219 = sphi %s210, %s210
        $region133: #{unpool_layer.1} parent=129 // loop_header_branch
          %216 = sbr.rel (%p214) target = $region137
        $region134: #{unpool_layer.1} parent=129 // loop_body
          %v220 = vld [vmem:[%s218] sm:%s211]
          %221 = vst [vmem:[%s219] sm:%s211] %v220
        $region135: #{unpool_layer.1} parent=129 // loop_footer
          %s217 = sadd.s32 1, %s213
        $region136: #{unpool_layer.1} parent=129 // loop_footer_branch
          %212 = sbr.rel target = $region132
        $region137: #{unpool_layer.1} parent=129 // loop_exit
          _
      $region130: #{unpool_layer.1} parent=114 // pred_fallthru
        _
    $region115: #{unpool_layer.1} parent=110 // pred_fallthru
      _
    // Predicated region
    $region116: #{unpool_layer.1} parent=110 // pred_check
      %p187 = pneg %p183
    $region117: #{unpool_layer.1} parent=110 // pred_check_branch
      %189 = sbr.rel (%p187) target = $region119
    $region118: #{unpool_layer.1} parent=110 // pred_region
      %s190 = sshllo.u32 0, 1
      loop: start=0, step=1, limit=1
      $region120: #{unpool_layer.1} parent=118 // loop_pre_header
        _
      $region121: #{unpool_layer.1} parent=118 // loop_header
        %s192 = sphi 0, %s196
        %p193 = scmp.ge.s32.totalorder %s192, 1
        %s197 = sphi %s179, %s179
        %s198 = sphi %s180, %s180
      $region122: #{unpool_layer.1} parent=118 // loop_header_branch
        %195 = sbr.rel (%p193) target = $region126
      $region123: #{unpool_layer.1} parent=118 // loop_body
        %v199 = vld [vmem:[%s197] sm:%s190]
        %200 = vst [vmem:[%s198] sm:%s190] %v199
      $region124: #{unpool_layer.1} parent=118 // loop_footer
        %s196 = sadd.s32 1, %s192
      $region125: #{unpool_layer.1} parent=118 // loop_footer_branch
        %191 = sbr.rel target = $region121
      $region126: #{unpool_layer.1} parent=118 // loop_exit
        _
    $region119: #{unpool_layer.1} parent=110 // pred_fallthru
      _
    // Predicated region
    $region138: #{unpool_layer.1} parent=110 // pred_check
      _
    $region139: #{unpool_layer.1} parent=110 // pred_check_branch
      %224 = sbr.rel (0) target = $region141
    $region140: #{unpool_layer.1} parent=110 // pred_region
      %225 = vsyncadd %s181, 16
    $region141: #{unpool_layer.1} parent=110 // pred_fallthru
      _
  $region111: #{unpool_layer.1} parent=0 // pred_fallthru
    _
  // Predicated region
  $region142: #{unpool_layer.1} parent=0 // pred_check
    %p226 = pneg %p17
  $region143: #{unpool_layer.1} parent=0 // pred_check_branch
    %228 = sbr.rel (%p226) target = $region145
  $region144: #{unpool_layer.1} parent=0 // pred_region
    %s229 = smul.u32 1, 1
    %s230 = sshll.u32 %s229, 4
    %231 = dma.done [#allocation4], %s230
    %v232 = vld [vmem:[#allocation2] sm:$0x1]
    %v233 = vld [vmem:[%s1] sm:$0x1]
    %v234 = vadd.f32 %v232, %v233
    %235 = vst [vmem:[#allocation3] sm:$0x1] %v234
    %s236 = sld [smem:[#allocation7 + %s16]]
    %s237 = scalar_lea.vmem %s3, %s236
    %p239 = scmp.lt.u32.totalorder 1, 8
    %p240 = pneg %p239
    // Predicated region
    $region146: #{unpool_layer.1} parent=144 // pred_check
      _
    $region147: #{unpool_layer.1} parent=144 // pred_check_branch
      %242 = sbr.rel (%p239) target = $region149
    $region148: #{unpool_layer.1} parent=144 // pred_region
      %s257 = sand.u32 1, 7
      %p258 = scmp.eq.s32.totalorder %s257, 0
      %p259 = pneg %p258
      // Predicated region
      $region161: #{unpool_layer.1} parent=148 // pred_check
        _
      $region162: #{unpool_layer.1} parent=148 // pred_check_branch
        %261 = sbr.rel (%p258) target = $region164
      $region163: #{unpool_layer.1} parent=148 // pred_region
        %s262 = sand.u32 1, 7
        %s263 = ssub.s32 1, %s262
        %s264 = scalar_lea.vmem [#allocation3], %s263
        %s265 = ssub.s32 1, %s262
        %s266 = scalar_lea.vmem %s237, %s265
        %s267 = sshllo.u32 0, %s262
        loop: start=0, step=1, limit=1
        $region165: #{unpool_layer.1} parent=163 // loop_pre_header
          _
        $region166: #{unpool_layer.1} parent=163 // loop_header
          %s269 = sphi 0, %s273
          %p270 = scmp.ge.s32.totalorder %s269, 1
          %s274 = sphi %s264, %s264
          %s275 = sphi %s266, %s266
        $region167: #{unpool_layer.1} parent=163 // loop_header_branch
          %272 = sbr.rel (%p270) target = $region171
        $region168: #{unpool_layer.1} parent=163 // loop_body
          %v276 = vld [vmem:[%s274] sm:%s267]
          %277 = vst [vmem:[%s275] sm:%s267] %v276
        $region169: #{unpool_layer.1} parent=163 // loop_footer
          %s273 = sadd.s32 1, %s269
        $region170: #{unpool_layer.1} parent=163 // loop_footer_branch
          %268 = sbr.rel target = $region166
        $region171: #{unpool_layer.1} parent=163 // loop_exit
          _
      $region164: #{unpool_layer.1} parent=148 // pred_fallthru
        _
    $region149: #{unpool_layer.1} parent=144 // pred_fallthru
      _
    // Predicated region
    $region150: #{unpool_layer.1} parent=144 // pred_check
      %p243 = pneg %p239
    $region151: #{unpool_layer.1} parent=144 // pred_check_branch
      %245 = sbr.rel (%p243) target = $region153
    $region152: #{unpool_layer.1} parent=144 // pred_region
      %s246 = sshllo.u32 0, 1
      loop: start=0, step=1, limit=1
      $region154: #{unpool_layer.1} parent=152 // loop_pre_header
        _
      $region155: #{unpool_layer.1} parent=152 // loop_header
        %s248 = sphi 0, %s252
        %p249 = scmp.ge.s32.totalorder %s248, 1
        %s253 = sphi [#allocation3], [#allocation3]
        %s254 = sphi %s237, %s237
      $region156: #{unpool_layer.1} parent=152 // loop_header_branch
        %251 = sbr.rel (%p249) target = $region160
      $region157: #{unpool_layer.1} parent=152 // loop_body
        %v255 = vld [vmem:[%s253] sm:%s246]
        %256 = vst [vmem:[%s254] sm:%s246] %v255
      $region158: #{unpool_layer.1} parent=152 // loop_footer
        %s252 = sadd.s32 1, %s248
      $region159: #{unpool_layer.1} parent=152 // loop_footer_branch
        %247 = sbr.rel target = $region155
      $region160: #{unpool_layer.1} parent=152 // loop_exit
        _
    $region153: #{unpool_layer.1} parent=144 // pred_fallthru
      _
    // Predicated region
    $region172: #{unpool_layer.1} parent=144 // pred_check
      _
    $region173: #{unpool_layer.1} parent=144 // pred_check_branch
      %280 = sbr.rel (0) target = $region175
    $region174: #{unpool_layer.1} parent=144 // pred_region
      %281 = vsyncadd [#allocation5], 16
    $region175: #{unpool_layer.1} parent=144 // pred_fallthru
      _
  $region145: #{unpool_layer.1} parent=0 // pred_fallthru
    _
  %s282 = sadd.s32 %s16, 4
  %p283 = scmp.lt.s32.totalorder %s282, 8
  // Predicated region
  $region176: #{unpool_layer.1} parent=0 // pred_check
    %p284 = pneg %p283
  $region177: #{unpool_layer.1} parent=0 // pred_check_branch
    %286 = sbr.rel (%p284) target = $region179
  $region178: #{unpool_layer.1} parent=0 // pred_region
    %s287 = sld [smem:[#allocation7 + %s282]]
    %s288 = scalar_lea.vmem %s3, %s287
    %p290 = scmp.lt.u32.totalorder 1, 8
    %p291 = pneg %p290
    // Predicated region
    $region180: #{unpool_layer.1} parent=178 // pred_check
      _
    $region181: #{unpool_layer.1} parent=178 // pred_check_branch
      %293 = sbr.rel (%p290) target = $region183
    $region182: #{unpool_layer.1} parent=178 // pred_region
      %s308 = sand.u32 1, 7
      %p309 = scmp.eq.s32.totalorder %s308, 0
      %p310 = pneg %p309
      // Predicated region
      $region195: #{unpool_layer.1} parent=182 // pred_check
        _
      $region196: #{unpool_layer.1} parent=182 // pred_check_branch
        %312 = sbr.rel (%p309) target = $region198
      $region197: #{unpool_layer.1} parent=182 // pred_region
        %s313 = sand.u32 1, 7
        %s314 = ssub.s32 1, %s313
        %s315 = scalar_lea.vmem %s288, %s314
        %s316 = ssub.s32 1, %s313
        %s317 = scalar_lea.vmem [#allocation2], %s316
        %s318 = sshllo.u32 0, %s313
        loop: start=0, step=1, limit=1
        $region199: #{unpool_layer.1} parent=197 // loop_pre_header
          _
        $region200: #{unpool_layer.1} parent=197 // loop_header
          %s320 = sphi 0, %s324
          %p321 = scmp.ge.s32.totalorder %s320, 1
          %s325 = sphi %s315, %s315
          %s326 = sphi %s317, %s317
        $region201: #{unpool_layer.1} parent=197 // loop_header_branch
          %323 = sbr.rel (%p321) target = $region205
        $region202: #{unpool_layer.1} parent=197 // loop_body
          %v327 = vld [vmem:[%s325] sm:%s318]
          %328 = vst [vmem:[%s326] sm:%s318] %v327
        $region203: #{unpool_layer.1} parent=197 // loop_footer
          %s324 = sadd.s32 1, %s320
        $region204: #{unpool_layer.1} parent=197 // loop_footer_branch
          %319 = sbr.rel target = $region200
        $region205: #{unpool_layer.1} parent=197 // loop_exit
          _
      $region198: #{unpool_layer.1} parent=182 // pred_fallthru
        _
    $region183: #{unpool_layer.1} parent=178 // pred_fallthru
      _
    // Predicated region
    $region184: #{unpool_layer.1} parent=178 // pred_check
      %p294 = pneg %p290
    $region185: #{unpool_layer.1} parent=178 // pred_check_branch
      %296 = sbr.rel (%p294) target = $region187
    $region186: #{unpool_layer.1} parent=178 // pred_region
      %s297 = sshllo.u32 0, 1
      loop: start=0, step=1, limit=1
      $region188: #{unpool_layer.1} parent=186 // loop_pre_header
        _
      $region189: #{unpool_layer.1} parent=186 // loop_header
        %s299 = sphi 0, %s303
        %p300 = scmp.ge.s32.totalorder %s299, 1
        %s304 = sphi %s288, %s288
        %s305 = sphi [#allocation2], [#allocation2]
      $region190: #{unpool_layer.1} parent=186 // loop_header_branch
        %302 = sbr.rel (%p300) target = $region194
      $region191: #{unpool_layer.1} parent=186 // loop_body
        %v306 = vld [vmem:[%s304] sm:%s297]
        %307 = vst [vmem:[%s305] sm:%s297] %v306
      $region192: #{unpool_layer.1} parent=186 // loop_footer
        %s303 = sadd.s32 1, %s299
      $region193: #{unpool_layer.1} parent=186 // loop_footer_branch
        %298 = sbr.rel target = $region189
      $region194: #{unpool_layer.1} parent=186 // loop_exit
        _
    $region187: #{unpool_layer.1} parent=178 // pred_fallthru
      _
    // Predicated region
    $region206: #{unpool_layer.1} parent=178 // pred_check
      _
    $region207: #{unpool_layer.1} parent=178 // pred_check_branch
      %331 = sbr.rel (0) target = $region209
    $region208: #{unpool_layer.1} parent=178 // pred_region
      %332 = vsyncadd [#allocation4], 16
    $region209: #{unpool_layer.1} parent=178 // pred_fallthru
      _
  $region179: #{unpool_layer.1} parent=0 // pred_fallthru
    _
  // Predicated region
  $region210: #{unpool_layer.1} parent=0 // pred_check
    %p333 = pneg %p68
  $region211: #{unpool_layer.1} parent=0 // pred_check_branch
    %335 = sbr.rel (%p333) target = $region213
  $region212: #{unpool_layer.1} parent=0 // pred_region
    %s336 = scalar_lea.vmem [#allocation2], 1
    %s337 = scalar_lea.sflag [#allocation4], 1
    %s338 = smul.u32 1, 1
    %s339 = sshll.u32 %s338, 4
    %340 = dma.done %s337, %s339
    %v341 = vld [vmem:[%s336] sm:$0x1]
    %v342 = vld [vmem:[%s1 + $0x1] sm:$0x1]
    %v343 = vadd.f32 %v341, %v342
    %s344 = scalar_lea.vmem [#allocation3], 1
    %345 = vst [vmem:[%s344] sm:$0x1] %v343
    %s346 = sld [smem:[#allocation7 + %s67]]
    %s347 = scalar_lea.vmem %s3, %s346
    %s348 = scalar_lea.sflag [#allocation5], 1
    %p350 = scmp.lt.u32.totalorder 1, 8
    %p351 = pneg %p350
    // Predicated region
    $region214: #{unpool_layer.1} parent=212 // pred_check
      _
    $region215: #{unpool_layer.1} parent=212 // pred_check_branch
      %353 = sbr.rel (%p350) target = $region217
    $region216: #{unpool_layer.1} parent=212 // pred_region
      %s368 = sand.u32 1, 7
      %p369 = scmp.eq.s32.totalorder %s368, 0
      %p370 = pneg %p369
      // Predicated region
      $region229: #{unpool_layer.1} parent=216 // pred_check
        _
      $region230: #{unpool_layer.1} parent=216 // pred_check_branch
        %372 = sbr.rel (%p369) target = $region232
      $region231: #{unpool_layer.1} parent=216 // pred_region
        %s373 = sand.u32 1, 7
        %s374 = ssub.s32 1, %s373
        %s375 = scalar_lea.vmem %s344, %s374 [#allocation3]
        %s376 = ssub.s32 1, %s373
        %s377 = scalar_lea.vmem %s347, %s376
        %s378 = sshllo.u32 0, %s373
        loop: start=0, step=1, limit=1
        $region233: #{unpool_layer.1} parent=231 // loop_pre_header
          _
        $region234: #{unpool_layer.1} parent=231 // loop_header
          %s380 = sphi 0, %s384
          %p381 = scmp.ge.s32.totalorder %s380, 1
          %s385 = sphi %s375, %s375
          %s386 = sphi %s377, %s377
        $region235: #{unpool_layer.1} parent=231 // loop_header_branch
          %383 = sbr.rel (%p381) target = $region239
        $region236: #{unpool_layer.1} parent=231 // loop_body
          %v387 = vld [vmem:[%s385] sm:%s378]
          %388 = vst [vmem:[%s386] sm:%s378] %v387
        $region237: #{unpool_layer.1} parent=231 // loop_footer
          %s384 = sadd.s32 1, %s380
        $region238: #{unpool_layer.1} parent=231 // loop_footer_branch
          %379 = sbr.rel target = $region234
        $region239: #{unpool_layer.1} parent=231 // loop_exit
          _
      $region232: #{unpool_layer.1} parent=216 // pred_fallthru
        _
    $region217: #{unpool_layer.1} parent=212 // pred_fallthru
      _
    // Predicated region
    $region218: #{unpool_layer.1} parent=212 // pred_check
      %p354 = pneg %p350
    $region219: #{unpool_layer.1} parent=212 // pred_check_branch
      %356 = sbr.rel (%p354) target = $region221
    $region220: #{unpool_layer.1} parent=212 // pred_region
      %s357 = sshllo.u32 0, 1
      loop: start=0, step=1, limit=1
      $region222: #{unpool_layer.1} parent=220 // loop_pre_header
        _
      $region223: #{unpool_layer.1} parent=220 // loop_header
        %s359 = sphi 0, %s363
        %p360 = scmp.ge.s32.totalorder %s359, 1
        %s364 = sphi %s344, %s344
        %s365 = sphi %s347, %s347
      $region224: #{unpool_layer.1} parent=220 // loop_header_branch
        %362 = sbr.rel (%p360) target = $region228
      $region225: #{unpool_layer.1} parent=220 // loop_body
        %v366 = vld [vmem:[%s364] sm:%s357]
        %367 = vst [vmem:[%s365] sm:%s357] %v366
      $region226: #{unpool_layer.1} parent=220 // loop_footer
        %s363 = sadd.s32 1, %s359
      $region227: #{unpool_layer.1} parent=220 // loop_footer_branch
        %358 = sbr.rel target = $region223
      $region228: #{unpool_layer.1} parent=220 // loop_exit
        _
    $region221: #{unpool_layer.1} parent=212 // pred_fallthru
      _
    // Predicated region
    $region240: #{unpool_layer.1} parent=212 // pred_check
      _
    $region241: #{unpool_layer.1} parent=212 // pred_check_branch
      %391 = sbr.rel (0) target = $region243
    $region242: #{unpool_layer.1} parent=212 // pred_region
      %392 = vsyncadd %s348, 16
    $region243: #{unpool_layer.1} parent=212 // pred_fallthru
      _
  $region213: #{unpool_layer.1} parent=0 // pred_fallthru
    _
  %s393 = sadd.s32 %s16, 5
  %p394 = scmp.lt.s32.totalorder %s393, 8
  // Predicated region
  $region244: #{unpool_layer.1} parent=0 // pred_check
    %p395 = pneg %p394
  $region245: #{unpool_layer.1} parent=0 // pred_check_branch
    %397 = sbr.rel (%p395) target = $region247
  $region246: #{unpool_layer.1} parent=0 // pred_region
    %s398 = sld [smem:[#allocation7 + %s393]]
    %s399 = scalar_lea.vmem %s3, %s398
    %s400 = scalar_lea.vmem [#allocation2], 1
    %s401 = scalar_lea.sflag [#allocation4], 1
    %p403 = scmp.lt.u32.totalorder 1, 8
    %p404 = pneg %p403
    // Predicated region
    $region248: #{unpool_layer.1} parent=246 // pred_check
      _
    $region249: #{unpool_layer.1} parent=246 // pred_check_branch
      %406 = sbr.rel (%p403) target = $region251
    $region250: #{unpool_layer.1} parent=246 // pred_region
      %s421 = sand.u32 1, 7
      %p422 = scmp.eq.s32.totalorder %s421, 0
      %p423 = pneg %p422
      // Predicated region
      $region263: #{unpool_layer.1} parent=250 // pred_check
        _
      $region264: #{unpool_layer.1} parent=250 // pred_check_branch
        %425 = sbr.rel (%p422) target = $region266
      $region265: #{unpool_layer.1} parent=250 // pred_region
        %s426 = sand.u32 1, 7
        %s427 = ssub.s32 1, %s426
        %s428 = scalar_lea.vmem %s399, %s427
        %s429 = ssub.s32 1, %s426
        %s430 = scalar_lea.vmem %s400, %s429 [#allocation2]
        %s431 = sshllo.u32 0, %s426
        loop: start=0, step=1, limit=1
        $region267: #{unpool_layer.1} parent=265 // loop_pre_header
          _
        $region268: #{unpool_layer.1} parent=265 // loop_header
          %s433 = sphi 0, %s437
          %p434 = scmp.ge.s32.totalorder %s433, 1
          %s438 = sphi %s428, %s428
          %s439 = sphi %s430, %s430
        $region269: #{unpool_layer.1} parent=265 // loop_header_branch
          %436 = sbr.rel (%p434) target = $region273
        $region270: #{unpool_layer.1} parent=265 // loop_body
          %v440 = vld [vmem:[%s438] sm:%s431]
          %441 = vst [vmem:[%s439] sm:%s431] %v440
        $region271: #{unpool_layer.1} parent=265 // loop_footer
          %s437 = sadd.s32 1, %s433
        $region272: #{unpool_layer.1} parent=265 // loop_footer_branch
          %432 = sbr.rel target = $region268
        $region273: #{unpool_layer.1} parent=265 // loop_exit
          _
      $region266: #{unpool_layer.1} parent=250 // pred_fallthru
        _
    $region251: #{unpool_layer.1} parent=246 // pred_fallthru
      _
    // Predicated region
    $region252: #{unpool_layer.1} parent=246 // pred_check
      %p407 = pneg %p403
    $region253: #{unpool_layer.1} parent=246 // pred_check_branch
      %409 = sbr.rel (%p407) target = $region255
    $region254: #{unpool_layer.1} parent=246 // pred_region
      %s410 = sshllo.u32 0, 1
      loop: start=0, step=1, limit=1
      $region256: #{unpool_layer.1} parent=254 // loop_pre_header
        _
      $region257: #{unpool_layer.1} parent=254 // loop_header
        %s412 = sphi 0, %s416
        %p413 = scmp.ge.s32.totalorder %s412, 1
        %s417 = sphi %s399, %s399
        %s418 = sphi %s400, %s400
      $region258: #{unpool_layer.1} parent=254 // loop_header_branch
        %415 = sbr.rel (%p413) target = $region262
      $region259: #{unpool_layer.1} parent=254 // loop_body
        %v419 = vld [vmem:[%s417] sm:%s410]
        %420 = vst [vmem:[%s418] sm:%s410] %v419
      $region260: #{unpool_layer.1} parent=254 // loop_footer
        %s416 = sadd.s32 1, %s412
      $region261: #{unpool_layer.1} parent=254 // loop_footer_branch
        %411 = sbr.rel target = $region257
      $region262: #{unpool_layer.1} parent=254 // loop_exit
        _
    $region255: #{unpool_layer.1} parent=246 // pred_fallthru
      _
    // Predicated region
    $region274: #{unpool_layer.1} parent=246 // pred_check
      _
    $region275: #{unpool_layer.1} parent=246 // pred_check_branch
      %444 = sbr.rel (0) target = $region277
    $region276: #{unpool_layer.1} parent=246 // pred_region
      %445 = vsyncadd %s401, 16
    $region277: #{unpool_layer.1} parent=246 // pred_fallthru
      _
  $region247: #{unpool_layer.1} parent=0 // pred_fallthru
    _
  // Predicated region
  $region278: #{unpool_layer.1} parent=0 // pred_check
    %p446 = pneg %p121
  $region279: #{unpool_layer.1} parent=0 // pred_check_branch
    %448 = sbr.rel (%p446) target = $region281
  $region280: #{unpool_layer.1} parent=0 // pred_region
    %s449 = scalar_lea.vmem [#allocation2], 2
    %s450 = scalar_lea.sflag [#allocation4], 2
    %s451 = smul.u32 1, 1
    %s452 = sshll.u32 %s451, 4
    %453 = dma.done %s450, %s452
    %v454 = vld [vmem:[%s449] sm:$0x1]
    %v455 = vld [vmem:[%s1 + $0x2] sm:$0x1]
    %v456 = vadd.f32 %v454, %v455
    %s457 = scalar_lea.vmem [#allocation3], 2
    %458 = vst [vmem:[%s457] sm:$0x1] %v456
    %s459 = sld [smem:[#allocation7 + %s120]]
    %s460 = scalar_lea.vmem %s3, %s459
    %s461 = scalar_lea.sflag [#allocation5], 2
    %p463 = scmp.lt.u32.totalorder 1, 8
    %p464 = pneg %p463
    // Predicated region
    $region282: #{unpool_layer.1} parent=280 // pred_check
      _
    $region283: #{unpool_layer.1} parent=280 // pred_check_branch
      %466 = sbr.rel (%p463) target = $region285
    $region284: #{unpool_layer.1} parent=280 // pred_region
      %s481 = sand.u32 1, 7
      %p482 = scmp.eq.s32.totalorder %s481, 0
      %p483 = pneg %p482
      // Predicated region
      $region297: #{unpool_layer.1} parent=284 // pred_check
        _
      $region298: #{unpool_layer.1} parent=284 // pred_check_branch
        %485 = sbr.rel (%p482) target = $region300
      $region299: #{unpool_layer.1} parent=284 // pred_region
        %s486 = sand.u32 1, 7
        %s487 = ssub.s32 1, %s486
        %s488 = scalar_lea.vmem %s457, %s487 [#allocation3]
        %s489 = ssub.s32 1, %s486
        %s490 = scalar_lea.vmem %s460, %s489
        %s491 = sshllo.u32 0, %s486
        loop: start=0, step=1, limit=1
        $region301: #{unpool_layer.1} parent=299 // loop_pre_header
          _
        $region302: #{unpool_layer.1} parent=299 // loop_header
          %s493 = sphi 0, %s497
          %p494 = scmp.ge.s32.totalorder %s493, 1
          %s498 = sphi %s488, %s488
          %s499 = sphi %s490, %s490
        $region303: #{unpool_layer.1} parent=299 // loop_header_branch
          %496 = sbr.rel (%p494) target = $region307
        $region304: #{unpool_layer.1} parent=299 // loop_body
          %v500 = vld [vmem:[%s498] sm:%s491]
          %501 = vst [vmem:[%s499] sm:%s491] %v500
        $region305: #{unpool_layer.1} parent=299 // loop_footer
          %s497 = sadd.s32 1, %s493
        $region306: #{unpool_layer.1} parent=299 // loop_footer_branch
          %492 = sbr.rel target = $region302
        $region307: #{unpool_layer.1} parent=299 // loop_exit
          _
      $region300: #{unpool_layer.1} parent=284 // pred_fallthru
        _
    $region285: #{unpool_layer.1} parent=280 // pred_fallthru
      _
    // Predicated region
    $region286: #{unpool_layer.1} parent=280 // pred_check
      %p467 = pneg %p463
    $region287: #{unpool_layer.1} parent=280 // pred_check_branch
      %469 = sbr.rel (%p467) target = $region289
    $region288: #{unpool_layer.1} parent=280 // pred_region
      %s470 = sshllo.u32 0, 1
      loop: start=0, step=1, limit=1
      $region290: #{unpool_layer.1} parent=288 // loop_pre_header
        _
      $region291: #{unpool_layer.1} parent=288 // loop_header
        %s472 = sphi 0, %s476
        %p473 = scmp.ge.s32.totalorder %s472, 1
        %s477 = sphi %s457, %s457
        %s478 = sphi %s460, %s460
      $region292: #{unpool_layer.1} parent=288 // loop_header_branch
        %475 = sbr.rel (%p473) target = $region296
      $region293: #{unpool_layer.1} parent=288 // loop_body
        %v479 = vld [vmem:[%s477] sm:%s470]
        %480 = vst [vmem:[%s478] sm:%s470] %v479
      $region294: #{unpool_layer.1} parent=288 // loop_footer
        %s476 = sadd.s32 1, %s472
      $region295: #{unpool_layer.1} parent=288 // loop_footer_branch
        %471 = sbr.rel target = $region291
      $region296: #{unpool_layer.1} parent=288 // loop_exit
        _
    $region289: #{unpool_layer.1} parent=280 // pred_fallthru
      _
    // Predicated region
    $region308: #{unpool_layer.1} parent=280 // pred_check
      _
    $region309: #{unpool_layer.1} parent=280 // pred_check_branch
      %504 = sbr.rel (0) target = $region311
    $region310: #{unpool_layer.1} parent=280 // pred_region
      %505 = vsyncadd %s461, 16
    $region311: #{unpool_layer.1} parent=280 // pred_fallthru
      _
  $region281: #{unpool_layer.1} parent=0 // pred_fallthru
    _
  %s506 = sadd.s32 %s16, 6
  %p507 = scmp.lt.s32.totalorder %s506, 8
  // Predicated region
  $region312: #{unpool_layer.1} parent=0 // pred_check
    %p508 = pneg %p507
  $region313: #{unpool_layer.1} parent=0 // pred_check_branch
    %510 = sbr.rel (%p508) target = $region315
  $region314: #{unpool_layer.1} parent=0 // pred_region
    %s511 = sld [smem:[#allocation7 + %s506]]
    %s512 = scalar_lea.vmem %s3, %s511
    %s513 = scalar_lea.vmem [#allocation2], 2
    %s514 = scalar_lea.sflag [#allocation4], 2
    %p516 = scmp.lt.u32.totalorder 1, 8
    %p517 = pneg %p516
    // Predicated region
    $region316: #{unpool_layer.1} parent=314 // pred_check
      _
    $region317: #{unpool_layer.1} parent=314 // pred_check_branch
      %519 = sbr.rel (%p516) target = $region319
    $region318: #{unpool_layer.1} parent=314 // pred_region
      %s534 = sand.u32 1, 7
      %p535 = scmp.eq.s32.totalorder %s534, 0
      %p536 = pneg %p535
      // Predicated region
      $region331: #{unpool_layer.1} parent=318 // pred_check
        _
      $region332: #{unpool_layer.1} parent=318 // pred_check_branch
        %538 = sbr.rel (%p535) target = $region334
      $region333: #{unpool_layer.1} parent=318 // pred_region
        %s539 = sand.u32 1, 7
        %s540 = ssub.s32 1, %s539
        %s541 = scalar_lea.vmem %s512, %s540
        %s542 = ssub.s32 1, %s539
        %s543 = scalar_lea.vmem %s513, %s542 [#allocation2]
        %s544 = sshllo.u32 0, %s539
        loop: start=0, step=1, limit=1
        $region335: #{unpool_layer.1} parent=333 // loop_pre_header
          _
        $region336: #{unpool_layer.1} parent=333 // loop_header
          %s546 = sphi 0, %s550
          %p547 = scmp.ge.s32.totalorder %s546, 1
          %s551 = sphi %s541, %s541
          %s552 = sphi %s543, %s543
        $region337: #{unpool_layer.1} parent=333 // loop_header_branch
          %549 = sbr.rel (%p547) target = $region341
        $region338: #{unpool_layer.1} parent=333 // loop_body
          %v553 = vld [vmem:[%s551] sm:%s544]
          %554 = vst [vmem:[%s552] sm:%s544] %v553
        $region339: #{unpool_layer.1} parent=333 // loop_footer
          %s550 = sadd.s32 1, %s546
        $region340: #{unpool_layer.1} parent=333 // loop_footer_branch
          %545 = sbr.rel target = $region336
        $region341: #{unpool_layer.1} parent=333 // loop_exit
          _
      $region334: #{unpool_layer.1} parent=318 // pred_fallthru
        _
    $region319: #{unpool_layer.1} parent=314 // pred_fallthru
      _
    // Predicated region
    $region320: #{unpool_layer.1} parent=314 // pred_check
      %p520 = pneg %p516
    $region321: #{unpool_layer.1} parent=314 // pred_check_branch
      %522 = sbr.rel (%p520) target = $region323
    $region322: #{unpool_layer.1} parent=314 // pred_region
      %s523 = sshllo.u32 0, 1
      loop: start=0, step=1, limit=1
      $region324: #{unpool_layer.1} parent=322 // loop_pre_header
        _
      $region325: #{unpool_layer.1} parent=322 // loop_header
        %s525 = sphi 0, %s529
        %p526 = scmp.ge.s32.totalorder %s525, 1
        %s530 = sphi %s512, %s512
        %s531 = sphi %s513, %s513
      $region326: #{unpool_layer.1} parent=322 // loop_header_branch
        %528 = sbr.rel (%p526) target = $region330
      $region327: #{unpool_layer.1} parent=322 // loop_body
        %v532 = vld [vmem:[%s530] sm:%s523]
        %533 = vst [vmem:[%s531] sm:%s523] %v532
      $region328: #{unpool_layer.1} parent=322 // loop_footer
        %s529 = sadd.s32 1, %s525
      $region329: #{unpool_layer.1} parent=322 // loop_footer_branch
        %524 = sbr.rel target = $region325
      $region330: #{unpool_layer.1} parent=322 // loop_exit
        _
    $region323: #{unpool_layer.1} parent=314 // pred_fallthru
      _
    // Predicated region
    $region342: #{unpool_layer.1} parent=314 // pred_check
      _
    $region343: #{unpool_layer.1} parent=314 // pred_check_branch
      %557 = sbr.rel (0) target = $region345
    $region344: #{unpool_layer.1} parent=314 // pred_region
      %558 = vsyncadd %s514, 16
    $region345: #{unpool_layer.1} parent=314 // pred_fallthru
      _
  $region315: #{unpool_layer.1} parent=0 // pred_fallthru
    _
  // Predicated region
  $region346: #{unpool_layer.1} parent=0 // pred_check
    %p559 = pneg %p174
  $region347: #{unpool_layer.1} parent=0 // pred_check_branch
    %561 = sbr.rel (%p559) target = $region349
  $region348: #{unpool_layer.1} parent=0 // pred_region
    %s562 = scalar_lea.vmem [#allocation2], 3
    %s563 = scalar_lea.sflag [#allocation4], 3
    %s564 = smul.u32 1, 1
    %s565 = sshll.u32 %s564, 4
    %566 = dma.done %s563, %s565
    %v567 = vld [vmem:[%s562] sm:$0x1]
    %v568 = vld [vmem:[%s1 + $0x3] sm:$0x1]
    %v569 = vadd.f32 %v567, %v568
    %s570 = scalar_lea.vmem [#allocation3], 3
    %571 = vst [vmem:[%s570] sm:$0x1] %v569
    %s572 = sld [smem:[#allocation7 + %s173]]
    %s573 = scalar_lea.vmem %s3, %s572
    %s574 = scalar_lea.sflag [#allocation5], 3
    %p576 = scmp.lt.u32.totalorder 1, 8
    %p577 = pneg %p576
    // Predicated region
    $region350: #{unpool_layer.1} parent=348 // pred_check
      _
    $region351: #{unpool_layer.1} parent=348 // pred_check_branch
      %579 = sbr.rel (%p576) target = $region353
    $region352: #{unpool_layer.1} parent=348 // pred_region
      %s594 = sand.u32 1, 7
      %p595 = scmp.eq.s32.totalorder %s594, 0
      %p596 = pneg %p595
      // Predicated region
      $region365: #{unpool_layer.1} parent=352 // pred_check
        _
      $region366: #{unpool_layer.1} parent=352 // pred_check_branch
        %598 = sbr.rel (%p595) target = $region368
      $region367: #{unpool_layer.1} parent=352 // pred_region
        %s599 = sand.u32 1, 7
        %s600 = ssub.s32 1, %s599
        %s601 = scalar_lea.vmem %s570, %s600 [#allocation3]
        %s602 = ssub.s32 1, %s599
        %s603 = scalar_lea.vmem %s573, %s602
        %s604 = sshllo.u32 0, %s599
        loop: start=0, step=1, limit=1
        $region369: #{unpool_layer.1} parent=367 // loop_pre_header
          _
        $region370: #{unpool_layer.1} parent=367 // loop_header
          %s606 = sphi 0, %s610
          %p607 = scmp.ge.s32.totalorder %s606, 1
          %s611 = sphi %s601, %s601
          %s612 = sphi %s603, %s603
        $region371: #{unpool_layer.1} parent=367 // loop_header_branch
          %609 = sbr.rel (%p607) target = $region375
        $region372: #{unpool_layer.1} parent=367 // loop_body
          %v613 = vld [vmem:[%s611] sm:%s604]
          %614 = vst [vmem:[%s612] sm:%s604] %v613
        $region373: #{unpool_layer.1} parent=367 // loop_footer
          %s610 = sadd.s32 1, %s606
        $region374: #{unpool_layer.1} parent=367 // loop_footer_branch
          %605 = sbr.rel target = $region370
        $region375: #{unpool_layer.1} parent=367 // loop_exit
          _
      $region368: #{unpool_layer.1} parent=352 // pred_fallthru
        _
    $region353: #{unpool_layer.1} parent=348 // pred_fallthru
      _
    // Predicated region
    $region354: #{unpool_layer.1} parent=348 // pred_check
      %p580 = pneg %p576
    $region355: #{unpool_layer.1} parent=348 // pred_check_branch
      %582 = sbr.rel (%p580) target = $region357
    $region356: #{unpool_layer.1} parent=348 // pred_region
      %s583 = sshllo.u32 0, 1
      loop: start=0, step=1, limit=1
      $region358: #{unpool_layer.1} parent=356 // loop_pre_header
        _
      $region359: #{unpool_layer.1} parent=356 // loop_header
        %s585 = sphi 0, %s589
        %p586 = scmp.ge.s32.totalorder %s585, 1
        %s590 = sphi %s570, %s570
        %s591 = sphi %s573, %s573
      $region360: #{unpool_layer.1} parent=356 // loop_header_branch
        %588 = sbr.rel (%p586) target = $region364
      $region361: #{unpool_layer.1} parent=356 // loop_body
        %v592 = vld [vmem:[%s590] sm:%s583]
        %593 = vst [vmem:[%s591] sm:%s583] %v592
      $region362: #{unpool_layer.1} parent=356 // loop_footer
        %s589 = sadd.s32 1, %s585
      $region363: #{unpool_layer.1} parent=356 // loop_footer_branch
        %584 = sbr.rel target = $region359
      $region364: #{unpool_layer.1} parent=356 // loop_exit
        _
    $region357: #{unpool_layer.1} parent=348 // pred_fallthru
      _
    // Predicated region
    $region376: #{unpool_layer.1} parent=348 // pred_check
      _
    $region377: #{unpool_layer.1} parent=348 // pred_check_branch
      %617 = sbr.rel (0) target = $region379
    $region378: #{unpool_layer.1} parent=348 // pred_region
      %618 = vsyncadd %s574, 16
    $region379: #{unpool_layer.1} parent=348 // pred_fallthru
      _
  $region349: #{unpool_layer.1} parent=0 // pred_fallthru
    _
  %s619 = sadd.s32 %s16, 7
  %p620 = scmp.lt.s32.totalorder %s619, 8
  // Predicated region
  $region380: #{unpool_layer.1} parent=0 // pred_check
    %p621 = pneg %p620
  $region381: #{unpool_layer.1} parent=0 // pred_check_branch
    %623 = sbr.rel (%p621) target = $region383
  $region382: #{unpool_layer.1} parent=0 // pred_region
    %s624 = sld [smem:[#allocation7 + %s619]]
    %s625 = scalar_lea.vmem %s3, %s624
    %s626 = scalar_lea.vmem [#allocation2], 3
    %s627 = scalar_lea.sflag [#allocation4], 3
    %p629 = scmp.lt.u32.totalorder 1, 8
    %p630 = pneg %p629
    // Predicated region
    $region384: #{unpool_layer.1} parent=382 // pred_check
      _
    $region385: #{unpool_layer.1} parent=382 // pred_check_branch
      %632 = sbr.rel (%p629) target = $region387
    $region386: #{unpool_layer.1} parent=382 // pred_region
      %s647 = sand.u32 1, 7
      %p648 = scmp.eq.s32.totalorder %s647, 0
      %p649 = pneg %p648
      // Predicated region
      $region399: #{unpool_layer.1} parent=386 // pred_check
        _
      $region400: #{unpool_layer.1} parent=386 // pred_check_branch
        %651 = sbr.rel (%p648) target = $region402
      $region401: #{unpool_layer.1} parent=386 // pred_region
        %s652 = sand.u32 1, 7
        %s653 = ssub.s32 1, %s652
        %s654 = scalar_lea.vmem %s625, %s653
        %s655 = ssub.s32 1, %s652
        %s656 = scalar_lea.vmem %s626, %s655 [#allocation2]
        %s657 = sshllo.u32 0, %s652
        loop: start=0, step=1, limit=1
        $region403: #{unpool_layer.1} parent=401 // loop_pre_header
          _
        $region404: #{unpool_layer.1} parent=401 // loop_header
          %s659 = sphi 0, %s663
          %p660 = scmp.ge.s32.totalorder %s659, 1
          %s664 = sphi %s654, %s654
          %s665 = sphi %s656, %s656
        $region405: #{unpool_layer.1} parent=401 // loop_header_branch
          %662 = sbr.rel (%p660) target = $region409
        $region406: #{unpool_layer.1} parent=401 // loop_body
          %v666 = vld [vmem:[%s664] sm:%s657]
          %667 = vst [vmem:[%s665] sm:%s657] %v666
        $region407: #{unpool_layer.1} parent=401 // loop_footer
          %s663 = sadd.s32 1, %s659
        $region408: #{unpool_layer.1} parent=401 // loop_footer_branch
          %658 = sbr.rel target = $region404
        $region409: #{unpool_layer.1} parent=401 // loop_exit
          _
      $region402: #{unpool_layer.1} parent=386 // pred_fallthru
        _
    $region387: #{unpool_layer.1} parent=382 // pred_fallthru
      _
    // Predicated region
    $region388: #{unpool_layer.1} parent=382 // pred_check
      %p633 = pneg %p629
    $region389: #{unpool_layer.1} parent=382 // pred_check_branch
      %635 = sbr.rel (%p633) target = $region391
    $region390: #{unpool_layer.1} parent=382 // pred_region
      %s636 = sshllo.u32 0, 1
      loop: start=0, step=1, limit=1
      $region392: #{unpool_layer.1} parent=390 // loop_pre_header
        _
      $region393: #{unpool_layer.1} parent=390 // loop_header
        %s638 = sphi 0, %s642
        %p639 = scmp.ge.s32.totalorder %s638, 1
        %s643 = sphi %s625, %s625
        %s644 = sphi %s626, %s626
      $region394: #{unpool_layer.1} parent=390 // loop_header_branch
        %641 = sbr.rel (%p639) target = $region398
      $region395: #{unpool_layer.1} parent=390 // loop_body
        %v645 = vld [vmem:[%s643] sm:%s636]
        %646 = vst [vmem:[%s644] sm:%s636] %v645
      $region396: #{unpool_layer.1} parent=390 // loop_footer
        %s642 = sadd.s32 1, %s638
      $region397: #{unpool_layer.1} parent=390 // loop_footer_branch
        %637 = sbr.rel target = $region393
      $region398: #{unpool_layer.1} parent=390 // loop_exit
        _
    $region391: #{unpool_layer.1} parent=382 // pred_fallthru
      _
    // Predicated region
    $region410: #{unpool_layer.1} parent=382 // pred_check
      _
    $region411: #{unpool_layer.1} parent=382 // pred_check_branch
      %670 = sbr.rel (0) target = $region413
    $region412: #{unpool_layer.1} parent=382 // pred_region
      %671 = vsyncadd %s627, 16
    $region413: #{unpool_layer.1} parent=382 // pred_fallthru
      _
  $region383: #{unpool_layer.1} parent=0 // pred_fallthru
    _
  // Predicated region
  $region414: #{unpool_layer.1} parent=0 // pred_check
    %p672 = pneg %p17
  $region415: #{unpool_layer.1} parent=0 // pred_check_branch
    %674 = sbr.rel (%p672) target = $region417
  $region416: #{unpool_layer.1} parent=0 // pred_region
    %s675 = smul.u32 1, 1
    %s676 = sshll.u32 %s675, 4
    %677 = dma.done [#allocation5], %s676
  $region417: #{unpool_layer.1} parent=0 // pred_fallthru
    _
  // Predicated region
  $region418: #{unpool_layer.1} parent=0 // pred_check
    %p678 = pneg %p283
  $region419: #{unpool_layer.1} parent=0 // pred_check_branch
    %680 = sbr.rel (%p678) target = $region421
  $region420: #{unpool_layer.1} parent=0 // pred_region
    %s681 = smul.u32 1, 1
    %s682 = sshll.u32 %s681, 4
    %683 = dma.done [#allocation4], %s682
    %v684 = vld [vmem:[#allocation2] sm:$0x1]
    %v685 = vld [vmem:[%s1 + $0x4] sm:$0x1]
    %v686 = vadd.f32 %v684, %v685
    %687 = vst [vmem:[#allocation3] sm:$0x1] %v686
    %s688 = sld [smem:[#allocation7 + %s282]]
    %s689 = scalar_lea.vmem %s3, %s688
    %p691 = scmp.lt.u32.totalorder 1, 8
    %p692 = pneg %p691
    // Predicated region
    $region422: #{unpool_layer.1} parent=420 // pred_check
      _
    $region423: #{unpool_layer.1} parent=420 // pred_check_branch
      %694 = sbr.rel (%p691) target = $region425
    $region424: #{unpool_layer.1} parent=420 // pred_region
      %s709 = sand.u32 1, 7
      %p710 = scmp.eq.s32.totalorder %s709, 0
      %p711 = pneg %p710
      // Predicated region
      $region437: #{unpool_layer.1} parent=424 // pred_check
        _
      $region438: #{unpool_layer.1} parent=424 // pred_check_branch
        %713 = sbr.rel (%p710) target = $region440
      $region439: #{unpool_layer.1} parent=424 // pred_region
        %s714 = sand.u32 1, 7
        %s715 = ssub.s32 1, %s714
        %s716 = scalar_lea.vmem [#allocation3], %s715
        %s717 = ssub.s32 1, %s714
        %s718 = scalar_lea.vmem %s689, %s717
        %s719 = sshllo.u32 0, %s714
        loop: start=0, step=1, limit=1
        $region441: #{unpool_layer.1} parent=439 // loop_pre_header
          _
        $region442: #{unpool_layer.1} parent=439 // loop_header
          %s721 = sphi 0, %s725
          %p722 = scmp.ge.s32.totalorder %s721, 1
          %s726 = sphi %s716, %s716
          %s727 = sphi %s718, %s718
        $region443: #{unpool_layer.1} parent=439 // loop_header_branch
          %724 = sbr.rel (%p722) target = $region447
        $region444: #{unpool_layer.1} parent=439 // loop_body
          %v728 = vld [vmem:[%s726] sm:%s719]
          %729 = vst [vmem:[%s727] sm:%s719] %v728
        $region445: #{unpool_layer.1} parent=439 // loop_footer
          %s725 = sadd.s32 1, %s721
        $region446: #{unpool_layer.1} parent=439 // loop_footer_branch
          %720 = sbr.rel target = $region442
        $region447: #{unpool_layer.1} parent=439 // loop_exit
          _
      $region440: #{unpool_layer.1} parent=424 // pred_fallthru
        _
    $region425: #{unpool_layer.1} parent=420 // pred_fallthru
      _
    // Predicated region
    $region426: #{unpool_layer.1} parent=420 // pred_check
      %p695 = pneg %p691
    $region427: #{unpool_layer.1} parent=420 // pred_check_branch
      %697 = sbr.rel (%p695) target = $region429
    $region428: #{unpool_layer.1} parent=420 // pred_region
      %s698 = sshllo.u32 0, 1
      loop: start=0, step=1, limit=1
      $region430: #{unpool_layer.1} parent=428 // loop_pre_header
        _
      $region431: #{unpool_layer.1} parent=428 // loop_header
        %s700 = sphi 0, %s704
        %p701 = scmp.ge.s32.totalorder %s700, 1
        %s705 = sphi [#allocation3], [#allocation3]
        %s706 = sphi %s689, %s689
      $region432: #{unpool_layer.1} parent=428 // loop_header_branch
        %703 = sbr.rel (%p701) target = $region436
      $region433: #{unpool_layer.1} parent=428 // loop_body
        %v707 = vld [vmem:[%s705] sm:%s698]
        %708 = vst [vmem:[%s706] sm:%s698] %v707
      $region434: #{unpool_layer.1} parent=428 // loop_footer
        %s704 = sadd.s32 1, %s700
      $region435: #{unpool_layer.1} parent=428 // loop_footer_branch
        %699 = sbr.rel target = $region431
      $region436: #{unpool_layer.1} parent=428 // loop_exit
        _
    $region429: #{unpool_layer.1} parent=420 // pred_fallthru
      _
    // Predicated region
    $region448: #{unpool_layer.1} parent=420 // pred_check
      _
    $region449: #{unpool_layer.1} parent=420 // pred_check_branch
      %732 = sbr.rel (0) target = $region451
    $region450: #{unpool_layer.1} parent=420 // pred_region
      %733 = vsyncadd [#allocation5], 16
    $region451: #{unpool_layer.1} parent=420 // pred_fallthru
      _
  $region421: #{unpool_layer.1} parent=0 // pred_fallthru
    _
  // Predicated region
  $region452: #{unpool_layer.1} parent=0 // pred_check
    %p734 = pneg %p68
  $region453: #{unpool_layer.1} parent=0 // pred_check_branch
    %736 = sbr.rel (%p734) target = $region455
  $region454: #{unpool_layer.1} parent=0 // pred_region
    %s737 = scalar_lea.sflag [#allocation5], 1
    %s738 = smul.u32 1, 1
    %s739 = sshll.u32 %s738, 4
    %740 = dma.done %s737, %s739
  $region455: #{unpool_layer.1} parent=0 // pred_fallthru
    _
  // Predicated region
  $region456: #{unpool_layer.1} parent=0 // pred_check
    %p741 = pneg %p394
  $region457: #{unpool_layer.1} parent=0 // pred_check_branch
    %743 = sbr.rel (%p741) target = $region459
  $region458: #{unpool_layer.1} parent=0 // pred_region
    %s744 = scalar_lea.vmem [#allocation2], 1
    %s745 = scalar_lea.sflag [#allocation4], 1
    %s746 = smul.u32 1, 1
    %s747 = sshll.u32 %s746, 4
    %748 = dma.done %s745, %s747
    %v749 = vld [vmem:[%s744] sm:$0x1]
    %v750 = vld [vmem:[%s1 + $0x5] sm:$0x1]
    %v751 = vadd.f32 %v749, %v750
    %s752 = scalar_lea.vmem [#allocation3], 1
    %753 = vst [vmem:[%s752] sm:$0x1] %v751
    %s754 = sld [smem:[#allocation7 + %s393]]
    %s755 = scalar_lea.vmem %s3, %s754
    %s756 = scalar_lea.sflag [#allocation5], 1
    %p758 = scmp.lt.u32.totalorder 1, 8
    %p759 = pneg %p758
    // Predicated region
    $region460: #{unpool_layer.1} parent=458 // pred_check
      _
    $region461: #{unpool_layer.1} parent=458 // pred_check_branch
      %761 = sbr.rel (%p758) target = $region463
    $region462: #{unpool_layer.1} parent=458 // pred_region
      %s776 = sand.u32 1, 7
      %p777 = scmp.eq.s32.totalorder %s776, 0
      %p778 = pneg %p777
      // Predicated region
      $region475: #{unpool_layer.1} parent=462 // pred_check
        _
      $region476: #{unpool_layer.1} parent=462 // pred_check_branch
        %780 = sbr.rel (%p777) target = $region478
      $region477: #{unpool_layer.1} parent=462 // pred_region
        %s781 = sand.u32 1, 7
        %s782 = ssub.s32 1, %s781
        %s783 = scalar_lea.vmem %s752, %s782 [#allocation3]
        %s784 = ssub.s32 1, %s781
        %s785 = scalar_lea.vmem %s755, %s784
        %s786 = sshllo.u32 0, %s781
        loop: start=0, step=1, limit=1
        $region479: #{unpool_layer.1} parent=477 // loop_pre_header
          _
        $region480: #{unpool_layer.1} parent=477 // loop_header
          %s788 = sphi 0, %s792
          %p789 = scmp.ge.s32.totalorder %s788, 1
          %s793 = sphi %s783, %s783
          %s794 = sphi %s785, %s785
        $region481: #{unpool_layer.1} parent=477 // loop_header_branch
          %791 = sbr.rel (%p789) target = $region485
        $region482: #{unpool_layer.1} parent=477 // loop_body
          %v795 = vld [vmem:[%s793] sm:%s786]
          %796 = vst [vmem:[%s794] sm:%s786] %v795
        $region483: #{unpool_layer.1} parent=477 // loop_footer
          %s792 = sadd.s32 1, %s788
        $region484: #{unpool_layer.1} parent=477 // loop_footer_branch
          %787 = sbr.rel target = $region480
        $region485: #{unpool_layer.1} parent=477 // loop_exit
          _
      $region478: #{unpool_layer.1} parent=462 // pred_fallthru
        _
    $region463: #{unpool_layer.1} parent=458 // pred_fallthru
      _
    // Predicated region
    $region464: #{unpool_layer.1} parent=458 // pred_check
      %p762 = pneg %p758
    $region465: #{unpool_layer.1} parent=458 // pred_check_branch
      %764 = sbr.rel (%p762) target = $region467
    $region466: #{unpool_layer.1} parent=458 // pred_region
      %s765 = sshllo.u32 0, 1
      loop: start=0, step=1, limit=1
      $region468: #{unpool_layer.1} parent=466 // loop_pre_header
        _
      $region469: #{unpool_layer.1} parent=466 // loop_header
        %s767 = sphi 0, %s771
        %p768 = scmp.ge.s32.totalorder %s767, 1
        %s772 = sphi %s752, %s752
        %s773 = sphi %s755, %s755
      $region470: #{unpool_layer.1} parent=466 // loop_header_branch
        %770 = sbr.rel (%p768) target = $region474
      $region471: #{unpool_layer.1} parent=466 // loop_body
        %v774 = vld [vmem:[%s772] sm:%s765]
        %775 = vst [vmem:[%s773] sm:%s765] %v774
      $region472: #{unpool_layer.1} parent=466 // loop_footer
        %s771 = sadd.s32 1, %s767
      $region473: #{unpool_layer.1} parent=466 // loop_footer_branch
        %766 = sbr.rel target = $region469
      $region474: #{unpool_layer.1} parent=466 // loop_exit
        _
    $region467: #{unpool_layer.1} parent=458 // pred_fallthru
      _
    // Predicated region
    $region486: #{unpool_layer.1} parent=458 // pred_check
      _
    $region487: #{unpool_layer.1} parent=458 // pred_check_branch
      %799 = sbr.rel (0) target = $region489
    $region488: #{unpool_layer.1} parent=458 // pred_region
      %800 = vsyncadd %s756, 16
    $region489: #{unpool_layer.1} parent=458 // pred_fallthru
      _
  $region459: #{unpool_layer.1} parent=0 // pred_fallthru
    _
  // Predicated region
  $region490: #{unpool_layer.1} parent=0 // pred_check
    %p801 = pneg %p121
  $region491: #{unpool_layer.1} parent=0 // pred_check_branch
    %803 = sbr.rel (%p801) target = $region493
  $region492: #{unpool_layer.1} parent=0 // pred_region
    %s804 = scalar_lea.sflag [#allocation5], 2
    %s805 = smul.u32 1, 1
    %s806 = sshll.u32 %s805, 4
    %807 = dma.done %s804, %s806
  $region493: #{unpool_layer.1} parent=0 // pred_fallthru
    _
  // Predicated region
  $region494: #{unpool_layer.1} parent=0 // pred_check
    %p808 = pneg %p507
  $region495: #{unpool_layer.1} parent=0 // pred_check_branch
    %810 = sbr.rel (%p808) target = $region497
  $region496: #{unpool_layer.1} parent=0 // pred_region
    %s811 = scalar_lea.vmem [#allocation2], 2
    %s812 = scalar_lea.sflag [#allocation4], 2
    %s813 = smul.u32 1, 1
    %s814 = sshll.u32 %s813, 4
    %815 = dma.done %s812, %s814
    %v816 = vld [vmem:[%s811] sm:$0x1]
    %v817 = vld [vmem:[%s1 + $0x6] sm:$0x1]
    %v818 = vadd.f32 %v816, %v817
    %s819 = scalar_lea.vmem [#allocation3], 2
    %820 = vst [vmem:[%s819] sm:$0x1] %v818
    %s821 = sld [smem:[#allocation7 + %s506]]
    %s822 = scalar_lea.vmem %s3, %s821
    %s823 = scalar_lea.sflag [#allocation5], 2
    %p825 = scmp.lt.u32.totalorder 1, 8
    %p826 = pneg %p825
    // Predicated region
    $region498: #{unpool_layer.1} parent=496 // pred_check
      _
    $region499: #{unpool_layer.1} parent=496 // pred_check_branch
      %828 = sbr.rel (%p825) target = $region501
    $region500: #{unpool_layer.1} parent=496 // pred_region
      %s843 = sand.u32 1, 7
      %p844 = scmp.eq.s32.totalorder %s843, 0
      %p845 = pneg %p844
      // Predicated region
      $region513: #{unpool_layer.1} parent=500 // pred_check
        _
      $region514: #{unpool_layer.1} parent=500 // pred_check_branch
        %847 = sbr.rel (%p844) target = $region516
      $region515: #{unpool_layer.1} parent=500 // pred_region
        %s848 = sand.u32 1, 7
        %s849 = ssub.s32 1, %s848
        %s850 = scalar_lea.vmem %s819, %s849 [#allocation3]
        %s851 = ssub.s32 1, %s848
        %s852 = scalar_lea.vmem %s822, %s851
        %s853 = sshllo.u32 0, %s848
        loop: start=0, step=1, limit=1
        $region517: #{unpool_layer.1} parent=515 // loop_pre_header
          _
        $region518: #{unpool_layer.1} parent=515 // loop_header
          %s855 = sphi 0, %s859
          %p856 = scmp.ge.s32.totalorder %s855, 1
          %s860 = sphi %s850, %s850
          %s861 = sphi %s852, %s852
        $region519: #{unpool_layer.1} parent=515 // loop_header_branch
          %858 = sbr.rel (%p856) target = $region523
        $region520: #{unpool_layer.1} parent=515 // loop_body
          %v862 = vld [vmem:[%s860] sm:%s853]
          %863 = vst [vmem:[%s861] sm:%s853] %v862
        $region521: #{unpool_layer.1} parent=515 // loop_footer
          %s859 = sadd.s32 1, %s855
        $region522: #{unpool_layer.1} parent=515 // loop_footer_branch
          %854 = sbr.rel target = $region518
        $region523: #{unpool_layer.1} parent=515 // loop_exit
          _
      $region516: #{unpool_layer.1} parent=500 // pred_fallthru
        _
    $region501: #{unpool_layer.1} parent=496 // pred_fallthru
      _
    // Predicated region
    $region502: #{unpool_layer.1} parent=496 // pred_check
      %p829 = pneg %p825
    $region503: #{unpool_layer.1} parent=496 // pred_check_branch
      %831 = sbr.rel (%p829) target = $region505
    $region504: #{unpool_layer.1} parent=496 // pred_region
      %s832 = sshllo.u32 0, 1
      loop: start=0, step=1, limit=1
      $region506: #{unpool_layer.1} parent=504 // loop_pre_header
        _
      $region507: #{unpool_layer.1} parent=504 // loop_header
        %s834 = sphi 0, %s838
        %p835 = scmp.ge.s32.totalorder %s834, 1
        %s839 = sphi %s819, %s819
        %s840 = sphi %s822, %s822
      $region508: #{unpool_layer.1} parent=504 // loop_header_branch
        %837 = sbr.rel (%p835) target = $region512
      $region509: #{unpool_layer.1} parent=504 // loop_body
        %v841 = vld [vmem:[%s839] sm:%s832]
        %842 = vst [vmem:[%s840] sm:%s832] %v841
      $region510: #{unpool_layer.1} parent=504 // loop_footer
        %s838 = sadd.s32 1, %s834
      $region511: #{unpool_layer.1} parent=504 // loop_footer_branch
        %833 = sbr.rel target = $region507
      $region512: #{unpool_layer.1} parent=504 // loop_exit
        _
    $region505: #{unpool_layer.1} parent=496 // pred_fallthru
      _
    // Predicated region
    $region524: #{unpool_layer.1} parent=496 // pred_check
      _
    $region525: #{unpool_layer.1} parent=496 // pred_check_branch
      %866 = sbr.rel (0) target = $region527
    $region526: #{unpool_layer.1} parent=496 // pred_region
      %867 = vsyncadd %s823, 16
    $region527: #{unpool_layer.1} parent=496 // pred_fallthru
      _
  $region497: #{unpool_layer.1} parent=0 // pred_fallthru
    _
  // Predicated region
  $region528: #{unpool_layer.1} parent=0 // pred_check
    %p868 = pneg %p174
  $region529: #{unpool_layer.1} parent=0 // pred_check_branch
    %870 = sbr.rel (%p868) target = $region531
  $region530: #{unpool_layer.1} parent=0 // pred_region
    %s871 = scalar_lea.sflag [#allocation5], 3
    %s872 = smul.u32 1, 1
    %s873 = sshll.u32 %s872, 4
    %874 = dma.done %s871, %s873
  $region531: #{unpool_layer.1} parent=0 // pred_fallthru
    _
  // Predicated region
  $region532: #{unpool_layer.1} parent=0 // pred_check
    %p875 = pneg %p620
  $region533: #{unpool_layer.1} parent=0 // pred_check_branch
    %877 = sbr.rel (%p875) target = $region535
  $region534: #{unpool_layer.1} parent=0 // pred_region
    %s878 = scalar_lea.vmem [#allocation2], 3
    %s879 = scalar_lea.sflag [#allocation4], 3
    %s880 = smul.u32 1, 1
    %s881 = sshll.u32 %s880, 4
    %882 = dma.done %s879, %s881
    %v883 = vld [vmem:[%s878] sm:$0x1]
    %v884 = vld [vmem:[%s1 + $0x7] sm:$0x1]
    %v885 = vadd.f32 %v883, %v884
    %s886 = scalar_lea.vmem [#allocation3], 3
    %887 = vst [vmem:[%s886] sm:$0x1] %v885
    %s888 = sld [smem:[#allocation7 + %s619]]
    %s889 = scalar_lea.vmem %s3, %s888
    %s890 = scalar_lea.sflag [#allocation5], 3
    %p892 = scmp.lt.u32.totalorder 1, 8
    %p893 = pneg %p892
    // Predicated region
    $region536: #{unpool_layer.1} parent=534 // pred_check
      _
    $region537: #{unpool_layer.1} parent=534 // pred_check_branch
      %895 = sbr.rel (%p892) target = $region539
    $region538: #{unpool_layer.1} parent=534 // pred_region
      %s910 = sand.u32 1, 7
      %p911 = scmp.eq.s32.totalorder %s910, 0
      %p912 = pneg %p911
      // Predicated region
      $region551: #{unpool_layer.1} parent=538 // pred_check
        _
      $region552: #{unpool_layer.1} parent=538 // pred_check_branch
        %914 = sbr.rel (%p911) target = $region554
      $region553: #{unpool_layer.1} parent=538 // pred_region
        %s915 = sand.u32 1, 7
        %s916 = ssub.s32 1, %s915
        %s917 = scalar_lea.vmem %s886, %s916 [#allocation3]
        %s918 = ssub.s32 1, %s915
        %s919 = scalar_lea.vmem %s889, %s918
        %s920 = sshllo.u32 0, %s915
        loop: start=0, step=1, limit=1
        $region555: #{unpool_layer.1} parent=553 // loop_pre_header
          _
        $region556: #{unpool_layer.1} parent=553 // loop_header
          %s922 = sphi 0, %s926
          %p923 = scmp.ge.s32.totalorder %s922, 1
          %s927 = sphi %s917, %s917
          %s928 = sphi %s919, %s919
        $region557: #{unpool_layer.1} parent=553 // loop_header_branch
          %925 = sbr.rel (%p923) target = $region561
        $region558: #{unpool_layer.1} parent=553 // loop_body
          %v929 = vld [vmem:[%s927] sm:%s920]
          %930 = vst [vmem:[%s928] sm:%s920] %v929
        $region559: #{unpool_layer.1} parent=553 // loop_footer
          %s926 = sadd.s32 1, %s922
        $region560: #{unpool_layer.1} parent=553 // loop_footer_branch
          %921 = sbr.rel target = $region556
        $region561: #{unpool_layer.1} parent=553 // loop_exit
          _
      $region554: #{unpool_layer.1} parent=538 // pred_fallthru
        _
    $region539: #{unpool_layer.1} parent=534 // pred_fallthru
      _
    // Predicated region
    $region540: #{unpool_layer.1} parent=534 // pred_check
      %p896 = pneg %p892
    $region541: #{unpool_layer.1} parent=534 // pred_check_branch
      %898 = sbr.rel (%p896) target = $region543
    $region542: #{unpool_layer.1} parent=534 // pred_region
      %s899 = sshllo.u32 0, 1
      loop: start=0, step=1, limit=1
      $region544: #{unpool_layer.1} parent=542 // loop_pre_header
        _
      $region545: #{unpool_layer.1} parent=542 // loop_header
        %s901 = sphi 0, %s905
        %p902 = scmp.ge.s32.totalorder %s901, 1
        %s906 = sphi %s886, %s886
        %s907 = sphi %s889, %s889
      $region546: #{unpool_layer.1} parent=542 // loop_header_branch
        %904 = sbr.rel (%p902) target = $region550
      $region547: #{unpool_layer.1} parent=542 // loop_body
        %v908 = vld [vmem:[%s906] sm:%s899]
        %909 = vst [vmem:[%s907] sm:%s899] %v908
      $region548: #{unpool_layer.1} parent=542 // loop_footer
        %s905 = sadd.s32 1, %s901
      $region549: #{unpool_layer.1} parent=542 // loop_footer_branch
        %900 = sbr.rel target = $region545
      $region550: #{unpool_layer.1} parent=542 // loop_exit
        _
    $region543: #{unpool_layer.1} parent=534 // pred_fallthru
      _
    // Predicated region
    $region562: #{unpool_layer.1} parent=534 // pred_check
      _
    $region563: #{unpool_layer.1} parent=534 // pred_check_branch
      %933 = sbr.rel (0) target = $region565
    $region564: #{unpool_layer.1} parent=534 // pred_region
      %934 = vsyncadd %s890, 16
    $region565: #{unpool_layer.1} parent=534 // pred_fallthru
      _
  $region535: #{unpool_layer.1} parent=0 // pred_fallthru
    _
  // Predicated region
  $region566: #{unpool_layer.1} parent=0 // pred_check
    %p935 = pneg %p283
  $region567: #{unpool_layer.1} parent=0 // pred_check_branch
    %937 = sbr.rel (%p935) target = $region569
  $region568: #{unpool_layer.1} parent=0 // pred_region
    %s938 = smul.u32 1, 1
    %s939 = sshll.u32 %s938, 4
    %940 = dma.done [#allocation5], %s939
  $region569: #{unpool_layer.1} parent=0 // pred_fallthru
    _
  // Predicated region
  $region570: #{unpool_layer.1} parent=0 // pred_check
    %p941 = pneg %p394
  $region571: #{unpool_layer.1} parent=0 // pred_check_branch
    %943 = sbr.rel (%p941) target = $region573
  $region572: #{unpool_layer.1} parent=0 // pred_region
    %s944 = scalar_lea.sflag [#allocation5], 1
    %s945 = smul.u32 1, 1
    %s946 = sshll.u32 %s945, 4
    %947 = dma.done %s944, %s946
  $region573: #{unpool_layer.1} parent=0 // pred_fallthru
    _
  // Predicated region
  $region574: #{unpool_layer.1} parent=0 // pred_check
    %p948 = pneg %p507
  $region575: #{unpool_layer.1} parent=0 // pred_check_branch
    %950 = sbr.rel (%p948) target = $region577
  $region576: #{unpool_layer.1} parent=0 // pred_region
    %s951 = scalar_lea.sflag [#allocation5], 2
    %s952 = smul.u32 1, 1
    %s953 = sshll.u32 %s952, 4
    %954 = dma.done %s951, %s953
  $region577: #{unpool_layer.1} parent=0 // pred_fallthru
    _
  // Predicated region
  $region578: #{unpool_layer.1} parent=0 // pred_check
    %p955 = pneg %p620
  $region579: #{unpool_layer.1} parent=0 // pred_check_branch
    %957 = sbr.rel (%p955) target = $region581
  $region580: #{unpool_layer.1} parent=0 // pred_region
    %s958 = scalar_lea.sflag [#allocation5], 3
    %s959 = smul.u32 1, 1
    %s960 = sshll.u32 %s959, 4
    %961 = dma.done %s958, %s960
  $region581: #{unpool_layer.1} parent=0 // pred_fallthru
    _
  %962 = vsyncmov [#allocation4]
  %s963 = vpop.sfrf %962
  %p964 = scmp.eq.s32.totalorder %s963, 0
  %p965 = pneg %p964
  %967 = shalt.err (%p965)
  %s968 = scalar_lea.sflag [#allocation4], 1
  %969 = vsyncmov %s968
  %s970 = vpop.sfrf %969
  %p971 = scmp.eq.s32.totalorder %s970, 0
  %p972 = pneg %p971
  %974 = shalt.err (%p972)
  %s975 = scalar_lea.sflag [#allocation4], 2
  %976 = vsyncmov %s975
  %s977 = vpop.sfrf %976
  %p978 = scmp.eq.s32.totalorder %s977, 0
  %p979 = pneg %p978
  %981 = shalt.err (%p979)
  %s982 = scalar_lea.sflag [#allocation4], 3
  %983 = vsyncmov %s982
  %s984 = vpop.sfrf %983
  %p985 = scmp.eq.s32.totalorder %s984, 0
  %p986 = pneg %p985
  %988 = shalt.err (%p986)
  %989 = vsyncmov [#allocation5]
  %s990 = vpop.sfrf %989
  %p991 = scmp.eq.s32.totalorder %s990, 0
  %p992 = pneg %p991
  %994 = shalt.err (%p992)
  %s995 = scalar_lea.sflag [#allocation5], 1
  %996 = vsyncmov %s995
  %s997 = vpop.sfrf %996
  %p998 = scmp.eq.s32.totalorder %s997, 0
  %p999 = pneg %p998
  %1001 = shalt.err (%p999)
  %s1002 = scalar_lea.sflag [#allocation5], 2
  %1003 = vsyncmov %s1002
  %s1004 = vpop.sfrf %1003
  %p1005 = scmp.eq.s32.totalorder %s1004, 0
  %p1006 = pneg %p1005
  %1008 = shalt.err (%p1006)
  %s1009 = scalar_lea.sflag [#allocation5], 3
  %1010 = vsyncmov %s1009
  %s1011 = vpop.sfrf %1010
  %p1012 = scmp.eq.s32.totalorder %s1011, 0
  %p1013 = pneg %p1012
  %1015 = shalt.err (%p1013)

</llo_original>
